<compile_context>
chip_gen: v5e
topology: v5e:2x2
jax: 0.10.0
libtpu: 0.0.40
codegen_flags: <defaults>
</compile_context>

<pallas_src>
import functools

import jax
import jax.numpy as jnp
from jax.experimental import pallas as pl
from jax.experimental.pallas import tpu as pltpu

_EPS = 1e-8
_LANE = 128


# ----------------------------------------------------------------------------------------
# Small helpers (generation-aware VMEM budgeting, lane padding, tile selection)
# ----------------------------------------------------------------------------------------
def _round_up(x, m):
    return (x + m - 1) // m * m


def _vmem_capacity_bytes():
    try:
        return int(pltpu.get_tpu_info().vmem_capacity_bytes)
    except Exception:
        return 64 << 20          # conservative (v7x per-TensorCore)


def _vmem_budget_bytes():
    # Working-set budget for tile selection (leave headroom under the physical capacity).
    return int(min(_vmem_capacity_bytes() // 2, 64 << 20))


def _vmem_limit_bytes():
    # Explicit scoped-VMEM limit (v5e default is only 16 MiB, v6e/v7x 32 MiB).
    return int(min(_vmem_capacity_bytes() * 3 // 4, 96 << 20))


def _pick_batch_tile(batch, row_bytes, const_bytes, budget):
    """Prefer a single full-batch block for small/medium batches (no pipeline bubbles,
    no duplicate weight DMAs); split only when the tile approaches the VMEM budget.
    Non-power-of-two / ragged batches fall back to one full-batch block."""
    def fits(tb, n_buf):
        return 2 * const_bytes + n_buf * tb * row_bytes <= budget

    if batch <= 1024 and fits(batch, 1):
        return batch
    for tb in (512, 256, 128, 64, 32, 16, 8):
        if batch % tb == 0 and fits(tb, 2):
            return tb
    return batch


def _const_spec(arr):
    """Full-array block whose index is constant across the batch grid -> VMEM-resident."""
    nd = arr.ndim
    return pl.BlockSpec(arr.shape, lambda *_: (0,) * nd)


# ----------------------------------------------------------------------------------------
# Kernel 1: (mean + standardize folded into W0) -> fused 9-field MLP chain -> unstandardize
# ----------------------------------------------------------------------------------------
def _fields_mlp_kernel(n_layers, x_ref, um_ref, us_ref, *refs):
    """refs = (w0, b0, ..., w_{L-1}, b_{L-1}, pred_ref, unstd_ref).

    x_ref     : (TB, S*D)            field_info tile, flattened over the sensor axis
    um/us     : (1, FDpad)           per-field mean/std, field-major, zero-padded
    w_l       : layer 0: (S*D, FDpad1) with mean+standardize folded in;
                layers >= 1: block-diagonal (FDpad_l, FDpad_{l+1})
    b_l       : (1, FDpad_{l+1})
    pred_ref  : (TB, FDpad)          standardized per-field predictions (lane-dense)
    unstd_ref : (TB, FDpad)          unstandardized per-field predictions (lane-dense)
    """
    param_refs = refs[: 2 * n_layers]
    pred_ref = refs[2 * n_layers]
    unstd_ref = refs[2 * n_layers + 1]

    h = x_ref[...]
    for l in range(n_layers):
        w = param_refs[2 * l][...]
        b = param_refs[2 * l + 1][...]
        # NOTE: for large batches, cast h/w to bf16 here (keep f32 accumulation) on v6e/v7x.
        h = jnp.dot(h, w, preferred_element_type=jnp.float32) + b
        if l < n_layers - 1:
            h = jnp.maximum(h, 0.0)                                   # ReLU (hidden only)

    pred_ref[...] = h
    # unstandardize_features(pred_f, mean_f, std_f)  (no clamp, matches the reference)
    unstd_ref[...] = h * us_ref[...] + um_ref[...]


# ----------------------------------------------------------------------------------------
# Kernel 2: standardize (precomputed inv_std) -> MLP_Final -> residual add
# ----------------------------------------------------------------------------------------
def _final_mlp_kernel(n_layers, u_ref, m_ref, inv_ref, *refs):
    param_refs = refs[: 2 * n_layers]
    out_ref = refs[2 * n_layers]

    x0 = (u_ref[...] - m_ref[...]) * inv_ref[...]
    h = x0
    for l in range(n_layers):
        w = param_refs[2 * l][...]
        b = param_refs[2 * l + 1][...]
        h = jnp.dot(h, w, preferred_element_type=jnp.float32) + b
        if l < n_layers - 1:
            h = jnp.maximum(h, 0.0)
    out_ref[...] = h + x0                                             # MLP_Final(x) + x


# ----------------------------------------------------------------------------------------
# Parameter packing (done ONCE at load time)
# ----------------------------------------------------------------------------------------
def pack_field_mlp_params(field_weights, field_biases, sel_mean, sel_std, seq_len):
    """Pack the F per-field MLPs into one lane-dense matmul chain.

    field_weights[l]: (F, d_l, d_{l+1})   (x @ W convention, i.e. W == W_pytorch.T)
    field_biases[l] : (F, d_{l+1})
    sel_mean/std    : (D,)  statistics of the SELECTED input field (field_idx)
    seq_len         : S     number of sensor tokens averaged by mean(dim=1)

    Layer 0 folds in the sequence-mean and the input standardization:
        h0 = ((mean_s x[s]) - m) / clamp(s) @ W0 + b0
           = x_flat @ tile(diag(1/clamp(s)) @ W0 / S, (S, 1)) + (b0 - (m/clamp(s)) @ W0)
    Deeper layers are block-diagonal so each field only sees its own activations.
    Every layer's output width is zero-padded to a multiple of 128 lanes.
    """
    inv_std = 1.0 / jnp.maximum(sel_std, _EPS)
    packed_w, packed_b = [], []
    prev_pad = None
    for l, (w, b) in enumerate(zip(field_weights, field_biases)):
        f, d_in, d_out = w.shape
        width = f * d_out
        pad = _round_up(width, _LANE)
        if l == 0:
            w_cat = jnp.transpose(w, (1, 0, 2)).reshape(d_in, width)      # (D, F*d1)
            b_cat = b.reshape(width)
            w_std = w_cat * inv_std[:, None]                              # fold standardize
            b_fold = b_cat - (sel_mean * inv_std) @ w_cat
            pw = jnp.tile(w_std / float(seq_len), (seq_len, 1))           # fold mean(dim=1)
            pb = b_fold
        else:
            eye = jnp.eye(f, dtype=w.dtype)
            bd = jnp.einsum("fio,fg->figo", w, eye).reshape(f * d_in, width)
            pw = jnp.zeros((prev_pad, width), w.dtype).at[: f * d_in, :].set(bd)
            pb = b.reshape(width)
        pw = jnp.pad(pw, ((0, 0), (0, pad - width)))                      # lane-pad N axis
        pb = jnp.pad(pb, (0, pad - width)).reshape(1, pad)
        packed_w.append(pw)
        packed_b.append(pb)
        prev_pad = pad
    return packed_w, packed_b


# ----------------------------------------------------------------------------------------
# Wrappers
# ----------------------------------------------------------------------------------------
def _predict_field_features(field_info, um_pad, us_pad, packed_w, packed_b, batch_tile):
    batch, seq, d_in = field_info.shape
    flat_d = seq * d_in
    fd_pad = packed_b[-1].shape[-1]
    n_layers = len(packed_w)

    x_flat = field_info.reshape(batch, flat_d)                            # contiguous, free

    params = []
    for w, b in zip(packed_w, packed_b):
        params += [w, b]

    const_bytes = 4 * (sum(int(p.size) for p in params) + um_pad.size + us_pad.size)
    row_bytes = 4 * (flat_d + 2 * fd_pad)
    tb = batch_tile if batch_tile is not None else _pick_batch_tile(
        batch, row_bytes, const_bytes, _vmem_budget_bytes())
    if batch % tb != 0:
        tb = batch
    grid = (batch // tb,)

    in_specs = (
        [pl.BlockSpec((tb, flat_d), lambda i: (i, 0))]
        + [_const_spec(a) for a in (um_pad, us_pad)]
        + [_const_spec(p) for p in params]
    )
    out_specs = [pl.BlockSpec((tb, fd_pad), lambda i: (i, 0)),
                 pl.BlockSpec((tb, fd_pad), lambda i: (i, 0))]
    out_shape = [jax.ShapeDtypeStruct((batch, fd_pad), jnp.float32),
                 jax.ShapeDtypeStruct((batch, fd_pad), jnp.float32)]

    flops = 2 * batch * sum(int(w.shape[0]) * int(w.shape[1]) for w in packed_w)
    bytes_accessed = 4 * (x_flat.size + sum(int(p.size) for p in params)
                          + um_pad.size + us_pad.size + 2 * batch * fd_pad)

    pred_flat, unstd_flat = pl.pallas_call(
        functools.partial(_fields_mlp_kernel, n_layers),
        grid=grid,
        in_specs=in_specs,
        out_specs=out_specs,
        out_shape=out_shape,
        compiler_params=pltpu.CompilerParams(
            dimension_semantics=("parallel",),
            vmem_limit_bytes=_vmem_limit_bytes()),
        cost_estimate=pl.CostEstimate(flops=int(flops), transcendentals=0,
                                      bytes_accessed=int(bytes_accessed)),
    )(x_flat, um_pad, us_pad, *params)
    return pred_flat, unstd_flat


def _unify_features(global_u, uni_mean, uni_std, final_w, final_b, batch_tile):
    batch, d_u = global_u.shape
    n_layers = len(final_w)
    d_out = final_w[-1].shape[1]
    assert d_out == d_u, "MLP_Final must preserve width for the residual add"

    m2 = uni_mean.reshape(1, d_u)
    inv2 = (1.0 / jnp.maximum(uni_std, _EPS)).reshape(1, d_u)             # precomputed inv_std
    params = []
    for w, b in zip(final_w, final_b):
        params += [w, b.reshape(1, -1)]

    const_bytes = 4 * (sum(int(p.size) for p in params) + m2.size + inv2.size)
    row_bytes = 4 * (d_u + d_out)
    tb = batch_tile if batch_tile is not None else _pick_batch_tile(
        batch, row_bytes, const_bytes, _vmem_budget_bytes())
    if batch % tb != 0:
        tb = batch
    grid = (batch // tb,)

    in_specs = ([pl.BlockSpec((tb, d_u), lambda i: (i, 0)), _const_spec(m2), _const_spec(inv2)]
                + [_const_spec(p) for p in params])
    flops = 2 * batch * sum(int(w.shape[0]) * int(w.shape[1]) for w in final_w)
    bytes_accessed = 4 * (global_u.size + sum(int(p.size) for p in params)
                          + m2.size + inv2.size + batch * d_out)

    return pl.pallas_call(
        functools.partial(_final_mlp_kernel, n_layers),
        grid=grid,
        in_specs=in_specs,
        out_specs=pl.BlockSpec((tb, d_out), lambda i: (i, 0)),
        out_shape=jax.ShapeDtypeStruct((batch, d_out), jnp.float32),
        compiler_params=pltpu.CompilerParams(
            dimension_semantics=("parallel",),
            vmem_limit_bytes=_vmem_limit_bytes()),
        cost_estimate=pl.CostEstimate(flops=int(flops), transcendentals=0,
                                      bytes_accessed=int(bytes_accessed)),
    )(global_u, m2, inv2, *params)


def finetuning_sensor_to_features_forward(
    Yin, Gin, num_heads, field_idx,
    field_means, field_stds,              # (F, D): mean/std_tensors['field_info_*'], stacked
    unified_mean, unified_std,            # (D,)  : mean/std_tensors['Unified']
    packed_mlp_w, packed_mlp_b,           # from pack_field_mlp_params (the F per-field MLPs)
    final_w, final_b,                     # MLP_Final: [(d_in, d_out)], [(d_out,)]
    pretrained_encode, pretrained_final_merge,
    batch_tile=None,
):
    """Pallas forward. Returns (Predicted_Features (B, d_last, F), U_Unified (B, D))."""
    # TODO(synk): PreTrained_net.{PosNet, MapperNet, Field_AttentionLayers} are injected
    # pretrained sub-modules with no definition in this spec; invoked via a callable.
    field_info = pretrained_encode(Yin, Gin, num_heads, field_idx)        # (B, S, D)

    batch, _, d_lat = field_info.shape
    num_fields, d_stat = field_means.shape
    assert d_lat == d_stat
    fd = num_fields * d_stat
    fd_pad = packed_mlp_b[-1].shape[-1]
    assert fd_pad >= fd, "packed output width must cover F * d_last"

    # Per-field statistics (field-major), zero-padded to the packed lane width.
    um_pad = jnp.pad(field_means.reshape(1, fd), ((0, 0), (0, fd_pad - fd)))
    us_pad = jnp.pad(field_stds.reshape(1, fd), ((0, 0), (0, fd_pad - fd)))

    pred_flat, unstd_flat = _predict_field_features(
        field_info, um_pad, us_pad, packed_mlp_w, packed_mlp_b, batch_tile)

    # Drop lane padding; kernel layout (B, F*d_last) -> PyTorch layout (B, d_last, F).
    pred_flat = pred_flat[:, :fd]
    unstd_flat = unstd_flat[:, :fd]
    predicted_features = pred_flat.reshape(batch, num_fields, d_stat).transpose(0, 2, 1)
    unstd_all = unstd_flat.reshape(batch, num_fields, d_stat).transpose(0, 2, 1)

    # TODO(synk): PreTrained_net.FinalMerge is an external pretrained module; invoked via the
    # user-supplied callable (mirrors `self.FinalMerge(UnSTD_compressed_info_ALL, -1)`).
    global_unified_u = pretrained_final_merge(unstd_all, -1)              # (B, D)

    u_unified = _unify_features(global_unified_u, unified_mean, unified_std,
                                final_w, final_b, batch_tile)
    return predicted_features, u_unified


# ----------------------------------------------------------------------------------------
# Pure-JAX reference (per-field loops, matching the PyTorch forward) for validation
# ----------------------------------------------------------------------------------------
def _reference_forward(Yin, Gin, num_heads, field_idx,
                       field_means, field_stds, unified_mean, unified_std,
                       field_w, field_b, final_w, final_b,
                       pretrained_encode, pretrained_final_merge):
    hp = jax.lax.Precision.HIGHEST
    field_info = pretrained_encode(Yin, Gin, num_heads, field_idx)
    comp = jnp.mean(field_info, axis=1)
    std_comp = (comp - field_means[field_idx]) / jnp.maximum(field_stds[field_idx], _EPS)

    num_fields = field_means.shape[0]
    feats = []
    for f in range(num_fields):
        h = std_comp
        for l in range(len(field_w)):
            h = jnp.dot(h, field_w[l][f], precision=hp) + field_b[l][f]
            if l < len(field_w) - 1:
                h = jnp.maximum(h, 0.0)
        feats.append(h)
    pred = jnp.stack(feats, axis=-1)                                      # (B, d_last, F)

    unstd = jnp.stack(
        [pred[:, :, f] * field_stds[f] + field_means[f] for f in range(num_fields)], axis=-1)
    global_u = pretrained_final_merge(unstd, -1)
    sgu = (global_u - unified_mean) / jnp.maximum(unified_std, _EPS)
    h = sgu
    for l in range(len(final_w)):
        h = jnp.dot(h, final_w[l], precision=hp) + final_b[l]
        if l < len(final_w) - 1:
            h = jnp.maximum(h, 0.0)
    return pred, h + sgu


if __name__ == "__main__":
    key = jax.random.PRNGKey(0)

    # Small shapes consistent with the module.
    num_fields = 9                    # ['T','P','Vx','Vy','O2','CO2','H2O','CO','H2']
    batch = 16
    seq = 8                           # sensor/position tokens fed to the pretrained encoder
    d_pos, d_sensor = 8, 8            # Yin / Gin feature widths
    d_lat = 32                        # latent width of field_info / compressed_info
    layer_sizes = [d_lat, 64, d_lat]          # per-field MLPs (out width == stats width)
    final_layer_sizes = [d_lat, 64, d_lat]    # MLP_Final (residual => in == out)
    num_heads = 4
    field_idx = 2                     # 'Vx'

    keys = jax.random.split(key, 12)
    Yin = jax.random.normal(keys[0], (batch, seq, d_pos), jnp.float32)
    Gin = jax.random.normal(keys[1], (batch, seq, d_sensor), jnp.float32)

    # ---- stand-ins for the external PreTrained_net (see TODO(synk) notes above) ----
    enc_w = 0.25 * jax.random.normal(keys[2], (d_pos + d_sensor, d_lat), jnp.float32)

    def pretrained_encode(yin, gin, n_heads, f_idx):
        # Stand-in for PosNet -> cat(Base_Y, Gin) -> MapperNet[field_idx] -> attention stack.
        del n_heads, f_idx
        return jnp.tanh(jnp.concatenate([yin, gin], axis=2) @ enc_w)      # (B, S, d_lat)

    def pretrained_final_merge(unstd_all, dim):
        # Stand-in for PreTrained_net.FinalMerge.
        return jnp.mean(unstd_all, axis=dim)

    # ---- mean_tensors / std_tensors as stacked arrays ----
    field_means = 0.1 * jax.random.normal(keys[3], (num_fields, d_lat), jnp.float32)
    field_stds = jax.random.uniform(keys[4], (num_fields, d_lat), jnp.float32, 0.5, 1.5)
    unified_mean = 0.1 * jax.random.normal(keys[5], (d_lat,), jnp.float32)
    unified_std = jax.random.uniform(keys[6], (d_lat,), jnp.float32, 0.5, 1.5)

    # ---- MLP parameters (x @ W + b convention, i.e. W == W_pytorch.T) ----
    def init_mlp(k, sizes, lead=()):
        ws, bs = [], []
        ks = jax.random.split(k, len(sizes) - 1)
        for i in range(len(sizes) - 1):
            kw, kb = jax.random.split(ks[i])
            bound = 1.0 / float(sizes[i]) ** 0.5
            ws.append(jax.random.uniform(kw, lead + (sizes[i], sizes[i + 1]),
                                         jnp.float32, -bound, bound))
            bs.append(jax.random.uniform(kb, lead + (sizes[i + 1],),
                                         jnp.float32, -bound, bound))
        return ws, bs

    field_w, field_b = init_mlp(keys[7], layer_sizes, lead=(num_fields,))
    final_w, final_b = init_mlp(keys[8], final_layer_sizes)

    # Pack the 9 per-field MLPs into the lane-dense / block-diagonal form; the sequence-mean
    # and the input standardization are folded into layer 0 (done ONCE at load time).
    packed_w, packed_b = pack_field_mlp_params(
        field_w, field_b, field_means[field_idx], field_stds[field_idx], seq)

    pred, u_unified = finetuning_sensor_to_features_forward(
        Yin, Gin, num_heads, field_idx,
        field_means, field_stds, unified_mean, unified_std,
        packed_w, packed_b, final_w, final_b,
        pretrained_encode, pretrained_final_merge,
        batch_tile=None,               # auto: single full-batch block at this size
    )
    pred, u_unified = jax.block_until_ready((pred, u_unified))

    ref_pred, ref_u = _reference_forward(
        Yin, Gin, num_heads, field_idx,
        field_means, field_stds, unified_mean, unified_std,
        field_w, field_b, final_w, final_b,
        pretrained_encode, pretrained_final_merge)

    assert pred.shape == (batch, layer_sizes[-1], num_fields)
    assert u_unified.shape == (batch, final_layer_sizes[-1])
    # Folding mean/standardize into W0 changes f32 rounding at the ~1e-6 level.
    assert jnp.allclose(pred, ref_pred, atol=1e-4, rtol=1e-4), "Predicted_Features mismatch"
    assert jnp.allclose(u_unified, ref_u, atol=1e-4, rtol=1e-4), "U_Unified mismatch"

    print("KERNEL_OK")
</pallas_src>

<mosaic_0001>
module attributes {stable_mosaic.version = 11 : i64} {
  func.func @_fields_mlp_kernel(%arg0: i32, %arg1: memref<16x256xf32, #tpu.memory_space<vmem>>, %arg2: memref<1x384xf32, #tpu.memory_space<vmem>>, %arg3: memref<1x384xf32, #tpu.memory_space<vmem>>, %arg4: memref<256x640xf32, #tpu.memory_space<vmem>>, %arg5: memref<1x640xf32, #tpu.memory_space<vmem>>, %arg6: memref<640x384xf32, #tpu.memory_space<vmem>>, %arg7: memref<1x384xf32, #tpu.memory_space<vmem>>, %arg8: memref<16x384xf32, #tpu.memory_space<vmem>>, %arg9: memref<16x384xf32, #tpu.memory_space<vmem>>) attributes {dimension_semantics = [#tpu.dimension_semantics<parallel>], iteration_bounds = array<i64: 1>, scalar_prefetch = 0 : i64, scratch_operands = 0 : i64, tpu.core_type = #tpu.core_type<tc>, window_params = [{transform_indices = @transform_0, window_bounds = array<i64: 16, 256>}, {pipeline_mode = #tpu.pipeline_mode<synchronous>, transform_indices = @transform_1, window_bounds = array<i64: 1, 384>}, {pipeline_mode = #tpu.pipeline_mode<synchronous>, transform_indices = @transform_2, window_bounds = array<i64: 1, 384>}, {pipeline_mode = #tpu.pipeline_mode<synchronous>, transform_indices = @transform_3, window_bounds = array<i64: 256, 640>}, {pipeline_mode = #tpu.pipeline_mode<synchronous>, transform_indices = @transform_4, window_bounds = array<i64: 1, 640>}, {pipeline_mode = #tpu.pipeline_mode<synchronous>, transform_indices = @transform_5, window_bounds = array<i64: 640, 384>}, {pipeline_mode = #tpu.pipeline_mode<synchronous>, transform_indices = @transform_6, window_bounds = array<i64: 1, 384>}, {transform_indices = @transform_7, window_bounds = array<i64: 16, 384>}, {transform_indices = @transform_8, window_bounds = array<i64: 16, 384>}]} {
    %c0 = arith.constant 0 : index
    %c0_0 = arith.constant 0 : index
    %0 = vector.load %arg1[%c0, %c0_0] : memref<16x256xf32, #tpu.memory_space<vmem>>, vector<16x256xf32>
    %c0_1 = arith.constant 0 : index
    %c0_2 = arith.constant 0 : index
    %1 = vector.load %arg4[%c0_1, %c0_2] : memref<256x640xf32, #tpu.memory_space<vmem>>, vector<256x640xf32>
    %c0_3 = arith.constant 0 : index
    %c0_4 = arith.constant 0 : index
    %2 = vector.load %arg5[%c0_3, %c0_4] : memref<1x640xf32, #tpu.memory_space<vmem>>, vector<1x640xf32>
    %cst = arith.constant dense<0.000000e+00> : vector<16x640xf32>
    %3 = tpu.matmul %0, %1, %cst {dimension_numbers = #tpu.dot_dimension_numbers<[1], [0], [0], [1], [0, 0, 1, 1], [], []>} : vector<16x256xf32>, vector<256x640xf32>, vector<16x640xf32> -> vector<16x640xf32>
    %4 = vector.broadcast %2 : vector<1x640xf32> to vector<16x640xf32>
    %5 = arith.addf %3, %4 : vector<16x640xf32>
    %cst_5 = arith.constant 0.000000e+00 : f32
    %6 = vector.broadcast %cst_5 : f32 to vector<16x640xf32>
    %7 = arith.maximumf %5, %6 : vector<16x640xf32>
    %c0_6 = arith.constant 0 : index
    %c0_7 = arith.constant 0 : index
    %8 = vector.load %arg6[%c0_6, %c0_7] : memref<640x384xf32, #tpu.memory_space<vmem>>, vector<640x384xf32>
    %c0_8 = arith.constant 0 : index
    %c0_9 = arith.constant 0 : index
    %9 = vector.load %arg7[%c0_8, %c0_9] : memref<1x384xf32, #tpu.memory_space<vmem>>, vector<1x384xf32>
    %cst_10 = arith.constant dense<0.000000e+00> : vector<16x384xf32>
    %10 = tpu.matmul %7, %8, %cst_10 {dimension_numbers = #tpu.dot_dimension_numbers<[1], [0], [0], [1], [0, 0, 1, 1], [], []>} : vector<16x640xf32>, vector<640x384xf32>, vector<16x384xf32> -> vector<16x384xf32>
    %11 = vector.broadcast %9 : vector<1x384xf32> to vector<16x384xf32>
    %12 = arith.addf %10, %11 : vector<16x384xf32>
    %c0_11 = arith.constant 0 : index
    %c0_12 = arith.constant 0 : index
    %13 = vector.load %arg8[%c0_11, %c0_12] : memref<16x384xf32, #tpu.memory_space<vmem>>, vector<16x384xf32>
    tpu.vector_store %arg8[%c0_11, %c0_12], %12 {strides = array<i32>} : memref<16x384xf32, #tpu.memory_space<vmem>>, vector<16x384xf32>,
    %c0_13 = arith.constant 0 : index
    %c0_14 = arith.constant 0 : index
    %14 = vector.load %arg3[%c0_13, %c0_14] : memref<1x384xf32, #tpu.memory_space<vmem>>, vector<1x384xf32>
    %15 = vector.broadcast %14 : vector<1x384xf32> to vector<16x384xf32>
    %16 = arith.mulf %12, %15 : vector<16x384xf32>
    %c0_15 = arith.constant 0 : index
    %c0_16 = arith.constant 0 : index
    %17 = vector.load %arg2[%c0_15, %c0_16] : memref<1x384xf32, #tpu.memory_space<vmem>>, vector<1x384xf32>
    %18 = vector.broadcast %17 : vector<1x384xf32> to vector<16x384xf32>
    %19 = arith.addf %16, %18 : vector<16x384xf32>
    %c0_17 = arith.constant 0 : index
    %c0_18 = arith.constant 0 : index
    %20 = vector.load %arg9[%c0_17, %c0_18] : memref<16x384xf32, #tpu.memory_space<vmem>>, vector<16x384xf32>
    tpu.vector_store %arg9[%c0_17, %c0_18], %19 {strides = array<i32>} : memref<16x384xf32, #tpu.memory_space<vmem>>, vector<16x384xf32>,
    return
  }
  func.func @transform_0(%arg0: i32) -> (i32, i32) {
    %c0_i32 = arith.constant 0 : i32
    %c0_i32_0 = arith.constant 0 : i32
    return %arg0, %c0_i32 : i32, i32
  }
  func.func @transform_1(%arg0: i32) -> (i32, i32) {
    %c0_i32 = arith.constant 0 : i32
    %c0_i32_0 = arith.constant 0 : i32
    %c0_i32_1 = arith.constant 0 : i32
    return %c0_i32, %c0_i32_0 : i32, i32
  }
  func.func @transform_2(%arg0: i32) -> (i32, i32) {
    %c0_i32 = arith.constant 0 : i32
    %c0_i32_0 = arith.constant 0 : i32
    %c0_i32_1 = arith.constant 0 : i32
    return %c0_i32, %c0_i32_0 : i32, i32
  }
  func.func @transform_3(%arg0: i32) -> (i32, i32) {
    %c0_i32 = arith.constant 0 : i32
    %c0_i32_0 = arith.constant 0 : i32
    %c0_i32_1 = arith.constant 0 : i32
    return %c0_i32, %c0_i32_0 : i32, i32
  }
  func.func @transform_4(%arg0: i32) -> (i32, i32) {
    %c0_i32 = arith.constant 0 : i32
    %c0_i32_0 = arith.constant 0 : i32
    %c0_i32_1 = arith.constant 0 : i32
    return %c0_i32, %c0_i32_0 : i32, i32
  }
  func.func @transform_5(%arg0: i32) -> (i32, i32) {
    %c0_i32 = arith.constant 0 : i32
    %c0_i32_0 = arith.constant 0 : i32
    %c0_i32_1 = arith.constant 0 : i32
    return %c0_i32, %c0_i32_0 : i32, i32
  }
  func.func @transform_6(%arg0: i32) -> (i32, i32) {
    %c0_i32 = arith.constant 0 : i32
    %c0_i32_0 = arith.constant 0 : i32
    %c0_i32_1 = arith.constant 0 : i32
    return %c0_i32, %c0_i32_0 : i32, i32
  }
  func.func @transform_7(%arg0: i32) -> (i32, i32) {
    %c0_i32 = arith.constant 0 : i32
    %c0_i32_0 = arith.constant 0 : i32
    return %arg0, %c0_i32 : i32, i32
  }
  func.func @transform_8(%arg0: i32) -> (i32, i32) {
    %c0_i32 = arith.constant 0 : i32
    %c0_i32_0 = arith.constant 0 : i32
    return %arg0, %c0_i32 : i32, i32
  }
}

</mosaic_0001>

<llo_original>
// kernel: tpu_custom_call.1
$region0: #{tpu_custom_call.1}
  #allocation0 [shape = 'u32[]', space=smem, size = 0x4, offset = 0x4, fixed_abs, tag = 'smem constant byte address 0x4 - core index']
  #allocation1 [shape = 'u32[72,128]{1,0:T(1,128)}', space=vmem, size = 0x9000, scoped, tag = 'internal scratch']
  %s0 = inlined_call_operand.hbm [shape: f32[16,256], index: 0, kind: input, shape index: {}]
  %s1 = inlined_call_operand.hbm [shape: f32[1,384], index: 1, kind: input, shape index: {}]
  %s2 = inlined_call_operand.hbm [shape: f32[1,384], index: 2, kind: input, shape index: {}]
  %s3 = inlined_call_operand.hbm [shape: f32[256,640], index: 3, kind: input, shape index: {}]
  %s4 = inlined_call_operand.hbm [shape: f32[1,640], index: 4, kind: input, shape index: {}]
  %s5 = inlined_call_operand.hbm [shape: f32[640,384], index: 5, kind: input, shape index: {}]
  %s6 = inlined_call_operand.vmem [shape: f32[1,384], index: 6, kind: input, shape index: {}]
  %s7 = inlined_call_operand.hbm [shape: f32[16,384], index: 7, kind: output, shape index: {0}]
  %s8 = inlined_call_operand.hbm [shape: f32[16,384], index: 8, kind: output, shape index: {1}]
  %9 = xla_tuple %s7, %s8
  %s10 = sld [smem:[#allocation0]]
  $region70: #{tpu_custom_call.1} parent=0
    _
  %s12 = ssub.s32 1, %s10
  %s13 = scalar_select 0, %s12, %s10
  $region1: #{tpu_custom_call.1} parent=0
    #allocation2 [shape = 'u8[16384]{0}', space=vmem, size = 0x4000, scoped, tag = 'input window, operand 0, single buffered']
    #allocation3 [shape = 's32[1]{0}', space=sflag, size = 0x4, scoped, tag = 'scoped memory for tpu_custom_call.1']
    #allocation4 [shape = 's32[1]{0}', space=sflag, size = 0x4, scoped, tag = 'scoped memory for tpu_custom_call.1']
    #allocation5 [shape = 'u8[1536]{0}', space=vmem, size = 0x800, scoped, tag = 'input window, operand 1, single buffered']
    #allocation6 [shape = 's32[1]{0}', space=sflag, size = 0x4, scoped, tag = 'scoped memory for tpu_custom_call.1']
    #allocation7 [shape = 'u8[1536]{0}', space=vmem, size = 0x800, scoped, tag = 'input window, operand 2, single buffered']
    #allocation8 [shape = 'u8[655360]{0}', space=vmem, size = 0xa0000, scoped, tag = 'input window, operand 3, single buffered']
    #allocation9 [shape = 's32[1]{0}', space=sflag, size = 0x4, scoped, tag = 'scoped memory for tpu_custom_call.1']
    #allocation10 [shape = 'u8[2560]{0}', space=vmem, size = 0xc00, scoped, tag = 'input window, operand 4, single buffered']
    #allocation11 [shape = 'u8[983040]{0}', space=vmem, size = 0xf0000, scoped, tag = 'input window, operand 5, single buffered']
    #allocation12 [shape = 's32[1]{0}', space=sflag, size = 0x4, scoped, tag = 'scoped memory for tpu_custom_call.1']
    #allocation13 [shape = 'u8[24576]{0}', space=vmem, size = 0x6000, scoped, tag = 'output window, operand 0, single buffered']
    #allocation14 [shape = 'u8[24576]{0}', space=vmem, size = 0x6000, scoped, tag = 'output window, operand 1, single buffered']
    #allocation15 [shape = 's32[1]{0}', space=sflag, size = 0x4, scoped, tag = 'scoped memory for tpu_custom_call.1']
    %14 = vsyncpa [#allocation3], 0
    %15 = vsyncpa [#allocation6], 0
    %16 = vsyncpa [#allocation9], 0
    %17 = vsyncpa [#allocation12], 0
    %18 = vsyncpa [#allocation4], 0
    %19 = vsyncpa [#allocation15], 0
    // Predicated region
    $region2: #{tpu_custom_call.1} parent=1 // pred_check
      _
    $region3: #{tpu_custom_call.1} parent=1 // pred_check_branch
      %21 = sbr.rel (0) target = $region5
    $region4: #{tpu_custom_call.1} parent=1 // pred_region
      %23 = vsyncadd [#allocation3], 0
      %s24 = sshll.u32 %s0, 4
      %s25 = int_to_ptr.hbm [resolvable:$true] %s24
      %s26 = sshll.u32 [#allocation2], 4
      %s27 = int_to_ptr.vmem [resolvable:$true] %s26
      %32 = dma.hbm_to_vmem [thread:$0]  %s25, 512, %s27, [#allocation3], 256, 256, 16
    $region5: #{tpu_custom_call.1} parent=1 // pred_fallthru
      _
    // Predicated region
    $region6: #{tpu_custom_call.1} parent=1 // pred_check
      _
    $region7: #{tpu_custom_call.1} parent=1 // pred_check_branch
      %34 = sbr.rel (0) target = $region9
    $region8: #{tpu_custom_call.1} parent=1 // pred_region
      %36 = vsyncadd [#allocation6], 0
      %s38 = sshll.u32 %s1, 4
      %s39 = int_to_ptr.hbm [resolvable:$true] %s38
      %s40 = sshll.u32 [#allocation5], 4
      %s41 = int_to_ptr.vmem [resolvable:$true] %s40
      %43 = dma.hbm_to_vmem [thread:$0]  %s39, 48, %s41, [#allocation6]
    $region9: #{tpu_custom_call.1} parent=1 // pred_fallthru
      _
    // Predicated region
    $region10: #{tpu_custom_call.1} parent=1 // pred_check
      _
    $region11: #{tpu_custom_call.1} parent=1 // pred_check_branch
      %45 = sbr.rel (0) target = $region13
    $region12: #{tpu_custom_call.1} parent=1 // pred_region
      %47 = vsyncadd [#allocation6], 0
      %s49 = sshll.u32 %s2, 4
      %s50 = int_to_ptr.hbm [resolvable:$true] %s49
      %s51 = sshll.u32 [#allocation7], 4
      %s52 = int_to_ptr.vmem [resolvable:$true] %s51
      %54 = dma.hbm_to_vmem [thread:$0]  %s50, 48, %s52, [#allocation6]
    $region13: #{tpu_custom_call.1} parent=1 // pred_fallthru
      _
    // Predicated region
    $region14: #{tpu_custom_call.1} parent=1 // pred_check
      _
    $region15: #{tpu_custom_call.1} parent=1 // pred_check_branch
      %56 = sbr.rel (0) target = $region17
    $region16: #{tpu_custom_call.1} parent=1 // pred_region
      %58 = vsyncadd [#allocation9], 0
      %s59 = sshll.u32 %s3, 4
      %s60 = int_to_ptr.hbm [resolvable:$true] %s59
      %s61 = sshll.u32 [#allocation8], 4
      %s62 = int_to_ptr.vmem [resolvable:$true] %s61
      %67 = dma.hbm_to_vmem [thread:$0]  %s60, 20480, %s62, [#allocation9], 640, 640, 40
    $region17: #{tpu_custom_call.1} parent=1 // pred_fallthru
      _
    // Predicated region
    $region18: #{tpu_custom_call.1} parent=1 // pred_check
      _
    $region19: #{tpu_custom_call.1} parent=1 // pred_check_branch
      %69 = sbr.rel (0) target = $region21
    $region20: #{tpu_custom_call.1} parent=1 // pred_region
      %71 = vsyncadd [#allocation9], 0
      %s73 = sshll.u32 %s4, 4
      %s74 = int_to_ptr.hbm [resolvable:$true] %s73
      %s75 = sshll.u32 [#allocation10], 4
      %s76 = int_to_ptr.vmem [resolvable:$true] %s75
      %78 = dma.hbm_to_vmem [thread:$0]  %s74, 80, %s76, [#allocation9]
    $region21: #{tpu_custom_call.1} parent=1 // pred_fallthru
      _
    // Predicated region
    $region22: #{tpu_custom_call.1} parent=1 // pred_check
      _
    $region23: #{tpu_custom_call.1} parent=1 // pred_check_branch
      %80 = sbr.rel (0) target = $region25
    $region24: #{tpu_custom_call.1} parent=1 // pred_region
      %82 = vsyncadd [#allocation12], 0
      %s83 = sshll.u32 %s5, 4
      %s84 = int_to_ptr.hbm [resolvable:$true] %s83
      %s85 = sshll.u32 [#allocation11], 4
      %s86 = int_to_ptr.vmem [resolvable:$true] %s85
      %91 = dma.hbm_to_vmem [thread:$0]  %s84, 30720, %s86, [#allocation12], 384, 384, 24
    $region25: #{tpu_custom_call.1} parent=1 // pred_fallthru
      _
    // Predicated region
    $region26: #{tpu_custom_call.1} parent=1 // pred_check
      _
    $region27: #{tpu_custom_call.1} parent=1 // pred_check_branch
      %93 = sbr.rel (0) target = $region29
    $region28: #{tpu_custom_call.1} parent=1 // pred_region
      _
    $region29: #{tpu_custom_call.1} parent=1 // pred_fallthru
      _
    // Predicated region
    $region30: #{tpu_custom_call.1} parent=1 // pred_check
      _
    $region31: #{tpu_custom_call.1} parent=1 // pred_check_branch
      %95 = sbr.rel (0) target = $region33
    $region32: #{tpu_custom_call.1} parent=1 // pred_region
      %97 = dma.done [#allocation3], 512
    $region33: #{tpu_custom_call.1} parent=1 // pred_fallthru
      _
    // Predicated region
    $region34: #{tpu_custom_call.1} parent=1 // pred_check
      _
    $region35: #{tpu_custom_call.1} parent=1 // pred_check_branch
      %99 = sbr.rel (0) target = $region37
    $region36: #{tpu_custom_call.1} parent=1 // pred_region
      %101 = dma.done [#allocation6], 48
    $region37: #{tpu_custom_call.1} parent=1 // pred_fallthru
      _
    // Predicated region
    $region38: #{tpu_custom_call.1} parent=1 // pred_check
      _
    $region39: #{tpu_custom_call.1} parent=1 // pred_check_branch
      %103 = sbr.rel (0) target = $region41
    $region40: #{tpu_custom_call.1} parent=1 // pred_region
      %105 = dma.done [#allocation6], 48
    $region41: #{tpu_custom_call.1} parent=1 // pred_fallthru
      _
    // Predicated region
    $region42: #{tpu_custom_call.1} parent=1 // pred_check
      _
    $region43: #{tpu_custom_call.1} parent=1 // pred_check_branch
      %107 = sbr.rel (0) target = $region45
    $region44: #{tpu_custom_call.1} parent=1 // pred_region
      %109 = dma.done [#allocation9], 20480
    $region45: #{tpu_custom_call.1} parent=1 // pred_fallthru
      _
    // Predicated region
    $region46: #{tpu_custom_call.1} parent=1 // pred_check
      _
    $region47: #{tpu_custom_call.1} parent=1 // pred_check_branch
      %111 = sbr.rel (0) target = $region49
    $region48: #{tpu_custom_call.1} parent=1 // pred_region
      %113 = dma.done [#allocation9], 80
    $region49: #{tpu_custom_call.1} parent=1 // pred_fallthru
      _
    // Predicated region
    $region50: #{tpu_custom_call.1} parent=1 // pred_check
      _
    $region51: #{tpu_custom_call.1} parent=1 // pred_check_branch
      %115 = sbr.rel (0) target = $region53
    $region52: #{tpu_custom_call.1} parent=1 // pred_region
      %117 = dma.done [#allocation12], 30720
    $region53: #{tpu_custom_call.1} parent=1 // pred_fallthru
      _
    %v118 = vld [vmem:[#allocation2] sm:$0xff]
    %v119 = vld [vmem:[#allocation2 + $0x8] sm:$0xff]
    %v120 = vld [vmem:[#allocation2 + $0x10] sm:$0xff]
    %v121 = vld [vmem:[#allocation2 + $0x18] sm:$0xff]
    %v122 = vld [vmem:[#allocation8] sm:$0xff]
    %v123 = vld [vmem:[#allocation8 + $0x8] sm:$0xff]
    %v124 = vld [vmem:[#allocation8 + $0x10] sm:$0xff]
    %v125 = vld [vmem:[#allocation8 + $0x18] sm:$0xff]
    %v126 = vld [vmem:[#allocation8 + $0x20] sm:$0xff]
    %v127 = vld [vmem:[#allocation8 + $0x28] sm:$0xff]
    %v128 = vld [vmem:[#allocation8 + $0x30] sm:$0xff]
    %v129 = vld [vmem:[#allocation8 + $0x38] sm:$0xff]
    %v130 = vld [vmem:[#allocation8 + $0x40] sm:$0xff]
    %v131 = vld [vmem:[#allocation8 + $0x48] sm:$0xff]
    %v132 = vld [vmem:[#allocation8 + $0x50] sm:$0xff]
    %v133 = vld [vmem:[#allocation8 + $0x58] sm:$0xff]
    %v134 = vld [vmem:[#allocation8 + $0x60] sm:$0xff]
    %v135 = vld [vmem:[#allocation8 + $0x68] sm:$0xff]
    %v136 = vld [vmem:[#allocation8 + $0x70] sm:$0xff]
    %v137 = vld [vmem:[#allocation8 + $0x78] sm:$0xff]
    %v138 = vld [vmem:[#allocation8 + $0x80] sm:$0xff]
    %v139 = vld [vmem:[#allocation8 + $0x88] sm:$0xff]
    %v140 = vld [vmem:[#allocation8 + $0x90] sm:$0xff]
    %v141 = vld [vmem:[#allocation8 + $0x98] sm:$0xff]
    %v142 = vld [vmem:[#allocation8 + $0xa0] sm:$0xff]
    %v143 = vld [vmem:[#allocation8 + $0xa8] sm:$0xff]
    %v144 = vld [vmem:[#allocation8 + $0xb0] sm:$0xff]
    %v145 = vld [vmem:[#allocation8 + $0xb8] sm:$0xff]
    %v146 = vld [vmem:[#allocation8 + $0xc0] sm:$0xff]
    %v147 = vld [vmem:[#allocation8 + $0xc8] sm:$0xff]
    %v148 = vld [vmem:[#allocation8 + $0xd0] sm:$0xff]
    %v149 = vld [vmem:[#allocation8 + $0xd8] sm:$0xff]
    %v150 = vld [vmem:[#allocation8 + $0xe0] sm:$0xff]
    %v151 = vld [vmem:[#allocation8 + $0xe8] sm:$0xff]
    %v152 = vld [vmem:[#allocation8 + $0xf0] sm:$0xff]
    %v153 = vld [vmem:[#allocation8 + $0xf8] sm:$0xff]
    %v154 = vld [vmem:[#allocation8 + $0x100] sm:$0xff]
    %v155 = vld [vmem:[#allocation8 + $0x108] sm:$0xff]
    %v156 = vld [vmem:[#allocation8 + $0x110] sm:$0xff]
    %v157 = vld [vmem:[#allocation8 + $0x118] sm:$0xff]
    %v158 = vld [vmem:[#allocation8 + $0x120] sm:$0xff]
    %v159 = vld [vmem:[#allocation8 + $0x128] sm:$0xff]
    %v160 = vld [vmem:[#allocation8 + $0x130] sm:$0xff]
    %v161 = vld [vmem:[#allocation8 + $0x138] sm:$0xff]
    %v162 = vld [vmem:[#allocation8 + $0x140] sm:$0xff]
    %v163 = vld [vmem:[#allocation8 + $0x148] sm:$0xff]
    %v164 = vld [vmem:[#allocation8 + $0x150] sm:$0xff]
    %v165 = vld [vmem:[#allocation8 + $0x158] sm:$0xff]
    %v166 = vld [vmem:[#allocation8 + $0x160] sm:$0xff]
    %v167 = vld [vmem:[#allocation8 + $0x168] sm:$0xff]
    %v168 = vld [vmem:[#allocation8 + $0x170] sm:$0xff]
    %v169 = vld [vmem:[#allocation8 + $0x178] sm:$0xff]
    %v170 = vld [vmem:[#allocation8 + $0x180] sm:$0xff]
    %v171 = vld [vmem:[#allocation8 + $0x188] sm:$0xff]
    %v172 = vld [vmem:[#allocation8 + $0x190] sm:$0xff]
    %v173 = vld [vmem:[#allocation8 + $0x198] sm:$0xff]
    %v174 = vld [vmem:[#allocation8 + $0x1a0] sm:$0xff]
    %v175 = vld [vmem:[#allocation8 + $0x1a8] sm:$0xff]
    %v176 = vld [vmem:[#allocation8 + $0x1b0] sm:$0xff]
    %v177 = vld [vmem:[#allocation8 + $0x1b8] sm:$0xff]
    %v178 = vld [vmem:[#allocation8 + $0x1c0] sm:$0xff]
    %v179 = vld [vmem:[#allocation8 + $0x1c8] sm:$0xff]
    %v180 = vld [vmem:[#allocation8 + $0x1d0] sm:$0xff]
    %v181 = vld [vmem:[#allocation8 + $0x1d8] sm:$0xff]
    %v182 = vld [vmem:[#allocation8 + $0x1e0] sm:$0xff]
    %v183 = vld [vmem:[#allocation8 + $0x1e8] sm:$0xff]
    %v184 = vld [vmem:[#allocation8 + $0x1f0] sm:$0xff]
    %v185 = vld [vmem:[#allocation8 + $0x1f8] sm:$0xff]
    %v186 = vld [vmem:[#allocation8 + $0x200] sm:$0xff]
    %v187 = vld [vmem:[#allocation8 + $0x208] sm:$0xff]
    %v188 = vld [vmem:[#allocation8 + $0x210] sm:$0xff]
    %v189 = vld [vmem:[#allocation8 + $0x218] sm:$0xff]
    %v190 = vld [vmem:[#allocation8 + $0x220] sm:$0xff]
    %v191 = vld [vmem:[#allocation8 + $0x228] sm:$0xff]
    %v192 = vld [vmem:[#allocation8 + $0x230] sm:$0xff]
    %v193 = vld [vmem:[#allocation8 + $0x238] sm:$0xff]
    %v194 = vld [vmem:[#allocation8 + $0x240] sm:$0xff]
    %v195 = vld [vmem:[#allocation8 + $0x248] sm:$0xff]
    %v196 = vld [vmem:[#allocation8 + $0x250] sm:$0xff]
    %v197 = vld [vmem:[#allocation8 + $0x258] sm:$0xff]
    %v198 = vld [vmem:[#allocation8 + $0x260] sm:$0xff]
    %v199 = vld [vmem:[#allocation8 + $0x268] sm:$0xff]
    %v200 = vld [vmem:[#allocation8 + $0x270] sm:$0xff]
    %v201 = vld [vmem:[#allocation8 + $0x278] sm:$0xff]
    %v202 = vld [vmem:[#allocation8 + $0x280] sm:$0xff]
    %v203 = vld [vmem:[#allocation8 + $0x288] sm:$0xff]
    %v204 = vld [vmem:[#allocation8 + $0x290] sm:$0xff]
    %v205 = vld [vmem:[#allocation8 + $0x298] sm:$0xff]
    %v206 = vld [vmem:[#allocation8 + $0x2a0] sm:$0xff]
    %v207 = vld [vmem:[#allocation8 + $0x2a8] sm:$0xff]
    %v208 = vld [vmem:[#allocation8 + $0x2b0] sm:$0xff]
    %v209 = vld [vmem:[#allocation8 + $0x2b8] sm:$0xff]
    %v210 = vld [vmem:[#allocation8 + $0x2c0] sm:$0xff]
    %v211 = vld [vmem:[#allocation8 + $0x2c8] sm:$0xff]
    %v212 = vld [vmem:[#allocation8 + $0x2d0] sm:$0xff]
    %v213 = vld [vmem:[#allocation8 + $0x2d8] sm:$0xff]
    %v214 = vld [vmem:[#allocation8 + $0x2e0] sm:$0xff]
    %v215 = vld [vmem:[#allocation8 + $0x2e8] sm:$0xff]
    %v216 = vld [vmem:[#allocation8 + $0x2f0] sm:$0xff]
    %v217 = vld [vmem:[#allocation8 + $0x2f8] sm:$0xff]
    %v218 = vld [vmem:[#allocation8 + $0x300] sm:$0xff]
    %v219 = vld [vmem:[#allocation8 + $0x308] sm:$0xff]
    %v220 = vld [vmem:[#allocation8 + $0x310] sm:$0xff]
    %v221 = vld [vmem:[#allocation8 + $0x318] sm:$0xff]
    %v222 = vld [vmem:[#allocation8 + $0x320] sm:$0xff]
    %v223 = vld [vmem:[#allocation8 + $0x328] sm:$0xff]
    %v224 = vld [vmem:[#allocation8 + $0x330] sm:$0xff]
    %v225 = vld [vmem:[#allocation8 + $0x338] sm:$0xff]
    %v226 = vld [vmem:[#allocation8 + $0x340] sm:$0xff]
    %v227 = vld [vmem:[#allocation8 + $0x348] sm:$0xff]
    %v228 = vld [vmem:[#allocation8 + $0x350] sm:$0xff]
    %v229 = vld [vmem:[#allocation8 + $0x358] sm:$0xff]
    %v230 = vld [vmem:[#allocation8 + $0x360] sm:$0xff]
    %v231 = vld [vmem:[#allocation8 + $0x368] sm:$0xff]
    %v232 = vld [vmem:[#allocation8 + $0x370] sm:$0xff]
    %v233 = vld [vmem:[#allocation8 + $0x378] sm:$0xff]
    %v234 = vld [vmem:[#allocation8 + $0x380] sm:$0xff]
    %v235 = vld [vmem:[#allocation8 + $0x388] sm:$0xff]
    %v236 = vld [vmem:[#allocation8 + $0x390] sm:$0xff]
    %v237 = vld [vmem:[#allocation8 + $0x398] sm:$0xff]
    %v238 = vld [vmem:[#allocation8 + $0x3a0] sm:$0xff]
    %v239 = vld [vmem:[#allocation8 + $0x3a8] sm:$0xff]
    %v240 = vld [vmem:[#allocation8 + $0x3b0] sm:$0xff]
    %v241 = vld [vmem:[#allocation8 + $0x3b8] sm:$0xff]
    %v242 = vld [vmem:[#allocation8 + $0x3c0] sm:$0xff]
    %v243 = vld [vmem:[#allocation8 + $0x3c8] sm:$0xff]
    %v244 = vld [vmem:[#allocation8 + $0x3d0] sm:$0xff]
    %v245 = vld [vmem:[#allocation8 + $0x3d8] sm:$0xff]
    %v246 = vld [vmem:[#allocation8 + $0x3e0] sm:$0xff]
    %v247 = vld [vmem:[#allocation8 + $0x3e8] sm:$0xff]
    %v248 = vld [vmem:[#allocation8 + $0x3f0] sm:$0xff]
    %v249 = vld [vmem:[#allocation8 + $0x3f8] sm:$0xff]
    %v250 = vld [vmem:[#allocation8 + $0x400] sm:$0xff]
    %v251 = vld [vmem:[#allocation8 + $0x408] sm:$0xff]
    %v252 = vld [vmem:[#allocation8 + $0x410] sm:$0xff]
    %v253 = vld [vmem:[#allocation8 + $0x418] sm:$0xff]
    %v254 = vld [vmem:[#allocation8 + $0x420] sm:$0xff]
    %v255 = vld [vmem:[#allocation8 + $0x428] sm:$0xff]
    %v256 = vld [vmem:[#allocation8 + $0x430] sm:$0xff]
    %v257 = vld [vmem:[#allocation8 + $0x438] sm:$0xff]
    %v258 = vld [vmem:[#allocation8 + $0x440] sm:$0xff]
    %v259 = vld [vmem:[#allocation8 + $0x448] sm:$0xff]
    %v260 = vld [vmem:[#allocation8 + $0x450] sm:$0xff]
    %v261 = vld [vmem:[#allocation8 + $0x458] sm:$0xff]
    %v262 = vld [vmem:[#allocation8 + $0x460] sm:$0xff]
    %v263 = vld [vmem:[#allocation8 + $0x468] sm:$0xff]
    %v264 = vld [vmem:[#allocation8 + $0x470] sm:$0xff]
    %v265 = vld [vmem:[#allocation8 + $0x478] sm:$0xff]
    %v266 = vld [vmem:[#allocation8 + $0x480] sm:$0xff]
    %v267 = vld [vmem:[#allocation8 + $0x488] sm:$0xff]
    %v268 = vld [vmem:[#allocation8 + $0x490] sm:$0xff]
    %v269 = vld [vmem:[#allocation8 + $0x498] sm:$0xff]
    %v270 = vld [vmem:[#allocation8 + $0x4a0] sm:$0xff]
    %v271 = vld [vmem:[#allocation8 + $0x4a8] sm:$0xff]
    %v272 = vld [vmem:[#allocation8 + $0x4b0] sm:$0xff]
    %v273 = vld [vmem:[#allocation8 + $0x4b8] sm:$0xff]
    %v274 = vld [vmem:[#allocation8 + $0x4c0] sm:$0xff]
    %v275 = vld [vmem:[#allocation8 + $0x4c8] sm:$0xff]
    %v276 = vld [vmem:[#allocation8 + $0x4d0] sm:$0xff]
    %v277 = vld [vmem:[#allocation8 + $0x4d8] sm:$0xff]
    %v278 = vld [vmem:[#allocation8 + $0x4e0] sm:$0xff]
    %v279 = vld [vmem:[#allocation8 + $0x4e8] sm:$0xff]
    %v280 = vld [vmem:[#allocation8 + $0x4f0] sm:$0xff]
    %v281 = vld [vmem:[#allocation8 + $0x4f8] sm:$0xff]
    %v282 = vld [vmem:[#allocation10] sm:$0x1f]
    %v284 = vperm.slane %v282, 0
    %v285 = vperm.slane %v282, 1
    %v286 = vperm.slane %v282, 2
    %v287 = vperm.slane %v282, 3
    %v288 = vperm.slane %v282, 4
    %294 = vmatpush.msra.mxu0 %v197
    %295 = vmatpush.msra.mxu0 %v192
    %296 = vmatpush.msra.mxu0 %v187
    %297 = vmatpush.msra.mxu0 %v182
    %298 = vmatpush.msra.mxu0 %v177
    %299 = vmatpush.msra.mxu0 %v172
    %300 = vmatpush.msra.mxu0 %v167
    %301 = vmatpush.msra.mxu0 %v162
    %302 = vmatpush.msra.mxu0 %v157
    %303 = vmatpush.msra.mxu0 %v152
    %304 = vmatpush.msra.mxu0 %v147
    %305 = vmatpush.msra.mxu0 %v142
    %306 = vmatpush.msra.mxu0 %v137
    %307 = vmatpush.msra.mxu0 %v132
    %308 = vmatpush.msra.mxu0 %v127
    %309 = vmatpush.msra.mxu0 %v122
    %310 = vmatmul.f32.gmra.mxu0 %v118
    %v311 = vpop.f32.mrf.mxu0
    %v312 = vadd.f32 %v284, %v311
    %313 = vmatmul.f32.gmra.mxu0 %v120
    %v314 = vpop.f32.mrf.mxu0
    %v315 = vadd.f32 %v284, %v314
    %316 = vdwg.mxu0
    %317 = vmatpush.msra.mxu0 %v277
    %318 = vmatpush.msra.mxu0 %v272
    %319 = vmatpush.msra.mxu0 %v267
    %320 = vmatpush.msra.mxu0 %v262
    %321 = vmatpush.msra.mxu0 %v257
    %322 = vmatpush.msra.mxu0 %v252
    %323 = vmatpush.msra.mxu0 %v247
    %324 = vmatpush.msra.mxu0 %v242
    %325 = vmatpush.msra.mxu0 %v237
    %326 = vmatpush.msra.mxu0 %v232
    %327 = vmatpush.msra.mxu0 %v227
    %328 = vmatpush.msra.mxu0 %v222
    %329 = vmatpush.msra.mxu0 %v217
    %330 = vmatpush.msra.mxu0 %v212
    %331 = vmatpush.msra.mxu0 %v207
    %332 = vmatpush.msra.mxu0 %v202
    %333 = vmatmul.f32.gmra.mxu0 %v119
    %v334 = vpop.f32.mrf.mxu0
    %v335 = vadd.f32 %v312, %v334
    %336 = vmatmul.f32.gmra.mxu0 %v121
    %v337 = vpop.f32.mrf.mxu0
    %v338 = vadd.f32 %v315, %v337
    %339 = vdwg.mxu0
    %340 = vmatpush.msra.mxu0 %v198
    %341 = vmatpush.msra.mxu0 %v193
    %342 = vmatpush.msra.mxu0 %v188
    %343 = vmatpush.msra.mxu0 %v183
    %344 = vmatpush.msra.mxu0 %v178
    %345 = vmatpush.msra.mxu0 %v173
    %346 = vmatpush.msra.mxu0 %v168
    %347 = vmatpush.msra.mxu0 %v163
    %348 = vmatpush.msra.mxu0 %v158
    %349 = vmatpush.msra.mxu0 %v153
    %350 = vmatpush.msra.mxu0 %v148
    %351 = vmatpush.msra.mxu0 %v143
    %352 = vmatpush.msra.mxu0 %v138
    %353 = vmatpush.msra.mxu0 %v133
    %354 = vmatpush.msra.mxu0 %v128
    %355 = vmatpush.msra.mxu0 %v123
    %356 = vmatmul.f32.gmra.mxu0 %v118
    %v357 = vpop.f32.mrf.mxu0
    %v358 = vadd.f32 %v285, %v357
    %359 = vmatmul.f32.gmra.mxu0 %v120
    %v360 = vpop.f32.mrf.mxu0
    %v361 = vadd.f32 %v285, %v360
    %362 = vdwg.mxu0
    %363 = vmatpush.msra.mxu0 %v278
    %364 = vmatpush.msra.mxu0 %v273
    %365 = vmatpush.msra.mxu0 %v268
    %366 = vmatpush.msra.mxu0 %v263
    %367 = vmatpush.msra.mxu0 %v258
    %368 = vmatpush.msra.mxu0 %v253
    %369 = vmatpush.msra.mxu0 %v248
    %370 = vmatpush.msra.mxu0 %v243
    %371 = vmatpush.msra.mxu0 %v238
    %372 = vmatpush.msra.mxu0 %v233
    %373 = vmatpush.msra.mxu0 %v228
    %374 = vmatpush.msra.mxu0 %v223
    %375 = vmatpush.msra.mxu0 %v218
    %376 = vmatpush.msra.mxu0 %v213
    %377 = vmatpush.msra.mxu0 %v208
    %378 = vmatpush.msra.mxu0 %v203
    %379 = vmatmul.f32.gmra.mxu0 %v119
    %v380 = vpop.f32.mrf.mxu0
    %v381 = vadd.f32 %v358, %v380
    %382 = vmatmul.f32.gmra.mxu0 %v121
    %v383 = vpop.f32.mrf.mxu0
    %v384 = vadd.f32 %v361, %v383
    %385 = vdwg.mxu0
    %386 = vmatpush.msra.mxu0 %v199
    %387 = vmatpush.msra.mxu0 %v194
    %388 = vmatpush.msra.mxu0 %v189
    %389 = vmatpush.msra.mxu0 %v184
    %390 = vmatpush.msra.mxu0 %v179
    %391 = vmatpush.msra.mxu0 %v174
    %392 = vmatpush.msra.mxu0 %v169
    %393 = vmatpush.msra.mxu0 %v164
    %394 = vmatpush.msra.mxu0 %v159
    %395 = vmatpush.msra.mxu0 %v154
    %396 = vmatpush.msra.mxu0 %v149
    %397 = vmatpush.msra.mxu0 %v144
    %398 = vmatpush.msra.mxu0 %v139
    %399 = vmatpush.msra.mxu0 %v134
    %400 = vmatpush.msra.mxu0 %v129
    %401 = vmatpush.msra.mxu0 %v124
    %402 = vmatmul.f32.gmra.mxu0 %v118
    %v403 = vpop.f32.mrf.mxu0
    %v404 = vadd.f32 %v286, %v403
    %405 = vmatmul.f32.gmra.mxu0 %v120
    %v406 = vpop.f32.mrf.mxu0
    %v407 = vadd.f32 %v286, %v406
    %408 = vdwg.mxu0
    %409 = vmatpush.msra.mxu0 %v279
    %410 = vmatpush.msra.mxu0 %v274
    %411 = vmatpush.msra.mxu0 %v269
    %412 = vmatpush.msra.mxu0 %v264
    %413 = vmatpush.msra.mxu0 %v259
    %414 = vmatpush.msra.mxu0 %v254
    %415 = vmatpush.msra.mxu0 %v249
    %416 = vmatpush.msra.mxu0 %v244
    %417 = vmatpush.msra.mxu0 %v239
    %418 = vmatpush.msra.mxu0 %v234
    %419 = vmatpush.msra.mxu0 %v229
    %420 = vmatpush.msra.mxu0 %v224
    %421 = vmatpush.msra.mxu0 %v219
    %422 = vmatpush.msra.mxu0 %v214
    %423 = vmatpush.msra.mxu0 %v209
    %424 = vmatpush.msra.mxu0 %v204
    %425 = vmatmul.f32.gmra.mxu0 %v119
    %v426 = vpop.f32.mrf.mxu0
    %v427 = vadd.f32 %v404, %v426
    %428 = vmatmul.f32.gmra.mxu0 %v121
    %v429 = vpop.f32.mrf.mxu0
    %v430 = vadd.f32 %v407, %v429
    %431 = vdwg.mxu0
    %432 = vmatpush.msra.mxu0 %v200
    %433 = vmatpush.msra.mxu0 %v195
    %434 = vmatpush.msra.mxu0 %v190
    %435 = vmatpush.msra.mxu0 %v185
    %436 = vmatpush.msra.mxu0 %v180
    %437 = vmatpush.msra.mxu0 %v175
    %438 = vmatpush.msra.mxu0 %v170
    %439 = vmatpush.msra.mxu0 %v165
    %440 = vmatpush.msra.mxu0 %v160
    %441 = vmatpush.msra.mxu0 %v155
    %442 = vmatpush.msra.mxu0 %v150
    %443 = vmatpush.msra.mxu0 %v145
    %444 = vmatpush.msra.mxu0 %v140
    %445 = vmatpush.msra.mxu0 %v135
    %446 = vmatpush.msra.mxu0 %v130
    %447 = vmatpush.msra.mxu0 %v125
    %448 = vmatmul.f32.gmra.mxu0 %v118
    %v449 = vpop.f32.mrf.mxu0
    %v450 = vadd.f32 %v287, %v449
    %451 = vmatmul.f32.gmra.mxu0 %v120
    %v452 = vpop.f32.mrf.mxu0
    %v453 = vadd.f32 %v287, %v452
    %454 = vdwg.mxu0
    %455 = vmatpush.msra.mxu0 %v280
    %456 = vmatpush.msra.mxu0 %v275
    %457 = vmatpush.msra.mxu0 %v270
    %458 = vmatpush.msra.mxu0 %v265
    %459 = vmatpush.msra.mxu0 %v260
    %460 = vmatpush.msra.mxu0 %v255
    %461 = vmatpush.msra.mxu0 %v250
    %462 = vmatpush.msra.mxu0 %v245
    %463 = vmatpush.msra.mxu0 %v240
    %464 = vmatpush.msra.mxu0 %v235
    %465 = vmatpush.msra.mxu0 %v230
    %466 = vmatpush.msra.mxu0 %v225
    %467 = vmatpush.msra.mxu0 %v220
    %468 = vmatpush.msra.mxu0 %v215
    %469 = vmatpush.msra.mxu0 %v210
    %470 = vmatpush.msra.mxu0 %v205
    %471 = vmatmul.f32.gmra.mxu0 %v119
    %v472 = vpop.f32.mrf.mxu0
    %v473 = vadd.f32 %v450, %v472
    %474 = vmatmul.f32.gmra.mxu0 %v121
    %v475 = vpop.f32.mrf.mxu0
    %v476 = vadd.f32 %v453, %v475
    %477 = vdwg.mxu0
    %478 = vmatpush.msra.mxu0 %v201
    %479 = vmatpush.msra.mxu0 %v196
    %480 = vmatpush.msra.mxu0 %v191
    %481 = vmatpush.msra.mxu0 %v186
    %482 = vmatpush.msra.mxu0 %v181
    %483 = vmatpush.msra.mxu0 %v176
    %484 = vmatpush.msra.mxu0 %v171
    %485 = vmatpush.msra.mxu0 %v166
    %486 = vmatpush.msra.mxu0 %v161
    %487 = vmatpush.msra.mxu0 %v156
    %488 = vmatpush.msra.mxu0 %v151
    %489 = vmatpush.msra.mxu0 %v146
    %490 = vmatpush.msra.mxu0 %v141
    %491 = vmatpush.msra.mxu0 %v136
    %492 = vmatpush.msra.mxu0 %v131
    %493 = vmatpush.msra.mxu0 %v126
    %494 = vmatmul.f32.gmra.mxu0 %v118
    %v495 = vpop.f32.mrf.mxu0
    %v496 = vadd.f32 %v288, %v495
    %497 = vmatmul.f32.gmra.mxu0 %v120
    %v498 = vpop.f32.mrf.mxu0
    %v499 = vadd.f32 %v288, %v498
    %500 = vdwg.mxu0
    %501 = vmatpush.msra.mxu0 %v281
    %502 = vmatpush.msra.mxu0 %v276
    %503 = vmatpush.msra.mxu0 %v271
    %504 = vmatpush.msra.mxu0 %v266
    %505 = vmatpush.msra.mxu0 %v261
    %506 = vmatpush.msra.mxu0 %v256
    %507 = vmatpush.msra.mxu0 %v251
    %508 = vmatpush.msra.mxu0 %v246
    %509 = vmatpush.msra.mxu0 %v241
    %510 = vmatpush.msra.mxu0 %v236
    %511 = vmatpush.msra.mxu0 %v231
    %512 = vmatpush.msra.mxu0 %v226
    %513 = vmatpush.msra.mxu0 %v221
    %514 = vmatpush.msra.mxu0 %v216
    %515 = vmatpush.msra.mxu0 %v211
    %516 = vmatpush.msra.mxu0 %v206
    %517 = vmatmul.f32.gmra.mxu0 %v119
    %v518 = vpop.f32.mrf.mxu0
    %v519 = vadd.f32 %v496, %v518
    %520 = vmatmul.f32.gmra.mxu0 %v121
    %v521 = vpop.f32.mrf.mxu0
    %v522 = vadd.f32 %v499, %v521
    %523 = vdwg.mxu0
    %v524 = vmax.f32 %v335, 0.0
    %v525 = vmax.f32 %v381, 0.0
    %v526 = vmax.f32 %v427, 0.0
    %v527 = vmax.f32 %v473, 0.0
    %v528 = vmax.f32 %v519, 0.0
    %v529 = vmax.f32 %v338, 0.0
    %v530 = vmax.f32 %v384, 0.0
    %v531 = vmax.f32 %v430, 0.0
    %v532 = vmax.f32 %v476, 0.0
    %v533 = vmax.f32 %v522, 0.0
    %v534 = vld [vmem:[#allocation11] sm:$0xff]
    %v535 = vld [vmem:[#allocation11 + $0x8] sm:$0xff]
    %v536 = vld [vmem:[#allocation11 + $0x10] sm:$0xff]
    %v537 = vld [vmem:[#allocation11 + $0x18] sm:$0xff]
    %v538 = vld [vmem:[#allocation11 + $0x20] sm:$0xff]
    %v539 = vld [vmem:[#allocation11 + $0x28] sm:$0xff]
    %v540 = vld [vmem:[#allocation11 + $0x30] sm:$0xff]
    %v541 = vld [vmem:[#allocation11 + $0x38] sm:$0xff]
    %v542 = vld [vmem:[#allocation11 + $0x40] sm:$0xff]
    %v543 = vld [vmem:[#allocation11 + $0x48] sm:$0xff]
    %v544 = vld [vmem:[#allocation11 + $0x50] sm:$0xff]
    %v545 = vld [vmem:[#allocation11 + $0x58] sm:$0xff]
    %v546 = vld [vmem:[#allocation11 + $0x60] sm:$0xff]
    %v547 = vld [vmem:[#allocation11 + $0x68] sm:$0xff]
    %v548 = vld [vmem:[#allocation11 + $0x70] sm:$0xff]
    %v549 = vld [vmem:[#allocation11 + $0x78] sm:$0xff]
    %v550 = vld [vmem:[#allocation11 + $0x80] sm:$0xff]
    %v551 = vld [vmem:[#allocation11 + $0x88] sm:$0xff]
    %v552 = vld [vmem:[#allocation11 + $0x90] sm:$0xff]
    %v553 = vld [vmem:[#allocation11 + $0x98] sm:$0xff]
    %v554 = vld [vmem:[#allocation11 + $0xa0] sm:$0xff]
    %v555 = vld [vmem:[#allocation11 + $0xa8] sm:$0xff]
    %v556 = vld [vmem:[#allocation11 + $0xb0] sm:$0xff]
    %v557 = vld [vmem:[#allocation11 + $0xb8] sm:$0xff]
    %v558 = vld [vmem:[#allocation11 + $0xc0] sm:$0xff]
    %v559 = vld [vmem:[#allocation11 + $0xc8] sm:$0xff]
    %v560 = vld [vmem:[#allocation11 + $0xd0] sm:$0xff]
    %v561 = vld [vmem:[#allocation11 + $0xd8] sm:$0xff]
    %v562 = vld [vmem:[#allocation11 + $0xe0] sm:$0xff]
    %v563 = vld [vmem:[#allocation11 + $0xe8] sm:$0xff]
    %v564 = vld [vmem:[#allocation11 + $0xf0] sm:$0xff]
    %v565 = vld [vmem:[#allocation11 + $0xf8] sm:$0xff]
    %v566 = vld [vmem:[#allocation11 + $0x100] sm:$0xff]
    %v567 = vld [vmem:[#allocation11 + $0x108] sm:$0xff]
    %v568 = vld [vmem:[#allocation11 + $0x110] sm:$0xff]
    %v569 = vld [vmem:[#allocation11 + $0x118] sm:$0xff]
    %v570 = vld [vmem:[#allocation11 + $0x120] sm:$0xff]
    %v571 = vld [vmem:[#allocation11 + $0x128] sm:$0xff]
    %v572 = vld [vmem:[#allocation11 + $0x130] sm:$0xff]
    %v573 = vld [vmem:[#allocation11 + $0x138] sm:$0xff]
    %v574 = vld [vmem:[#allocation11 + $0x140] sm:$0xff]
    %v575 = vld [vmem:[#allocation11 + $0x148] sm:$0xff]
    %v576 = vld [vmem:[#allocation11 + $0x150] sm:$0xff]
    %v577 = vld [vmem:[#allocation11 + $0x158] sm:$0xff]
    %v578 = vld [vmem:[#allocation11 + $0x160] sm:$0xff]
    %v579 = vld [vmem:[#allocation11 + $0x168] sm:$0xff]
    %v580 = vld [vmem:[#allocation11 + $0x170] sm:$0xff]
    %v581 = vld [vmem:[#allocation11 + $0x178] sm:$0xff]
    %v582 = vld [vmem:[#allocation11 + $0x180] sm:$0xff]
    %v583 = vld [vmem:[#allocation11 + $0x188] sm:$0xff]
    %v584 = vld [vmem:[#allocation11 + $0x190] sm:$0xff]
    %v585 = vld [vmem:[#allocation11 + $0x198] sm:$0xff]
    %v586 = vld [vmem:[#allocation11 + $0x1a0] sm:$0xff]
    %v587 = vld [vmem:[#allocation11 + $0x1a8] sm:$0xff]
    %v588 = vld [vmem:[#allocation11 + $0x1b0] sm:$0xff]
    %v589 = vld [vmem:[#allocation11 + $0x1b8] sm:$0xff]
    %v590 = vld [vmem:[#allocation11 + $0x1c0] sm:$0xff]
    %v591 = vld [vmem:[#allocation11 + $0x1c8] sm:$0xff]
    %v592 = vld [vmem:[#allocation11 + $0x1d0] sm:$0xff]
    %v593 = vld [vmem:[#allocation11 + $0x1d8] sm:$0xff]
    %v594 = vld [vmem:[#allocation11 + $0x1e0] sm:$0xff]
    %v595 = vld [vmem:[#allocation11 + $0x1e8] sm:$0xff]
    %v596 = vld [vmem:[#allocation11 + $0x1f0] sm:$0xff]
    %v597 = vld [vmem:[#allocation11 + $0x1f8] sm:$0xff]
    %v598 = vld [vmem:[#allocation11 + $0x200] sm:$0xff]
    %v599 = vld [vmem:[#allocation11 + $0x208] sm:$0xff]
    %v600 = vld [vmem:[#allocation11 + $0x210] sm:$0xff]
    %v601 = vld [vmem:[#allocation11 + $0x218] sm:$0xff]
    %v602 = vld [vmem:[#allocation11 + $0x220] sm:$0xff]
    %v603 = vld [vmem:[#allocation11 + $0x228] sm:$0xff]
    %v604 = vld [vmem:[#allocation11 + $0x230] sm:$0xff]
    %v605 = vld [vmem:[#allocation11 + $0x238] sm:$0xff]
    %v606 = vld [vmem:[#allocation11 + $0x240] sm:$0xff]
    %v607 = vld [vmem:[#allocation11 + $0x248] sm:$0xff]
    %v608 = vld [vmem:[#allocation11 + $0x250] sm:$0xff]
    %v609 = vld [vmem:[#allocation11 + $0x258] sm:$0xff]
    %v610 = vld [vmem:[#allocation11 + $0x260] sm:$0xff]
    %v611 = vld [vmem:[#allocation11 + $0x268] sm:$0xff]
    %v612 = vld [vmem:[#allocation11 + $0x270] sm:$0xff]
    %v613 = vld [vmem:[#allocation11 + $0x278] sm:$0xff]
    %v614 = vld [vmem:[#allocation11 + $0x280] sm:$0xff]
    %v615 = vld [vmem:[#allocation11 + $0x288] sm:$0xff]
    %v616 = vld [vmem:[#allocation11 + $0x290] sm:$0xff]
    %v617 = vld [vmem:[#allocation11 + $0x298] sm:$0xff]
    %v618 = vld [vmem:[#allocation11 + $0x2a0] sm:$0xff]
    %v619 = vld [vmem:[#allocation11 + $0x2a8] sm:$0xff]
    %v620 = vld [vmem:[#allocation11 + $0x2b0] sm:$0xff]
    %v621 = vld [vmem:[#allocation11 + $0x2b8] sm:$0xff]
    %v622 = vld [vmem:[#allocation11 + $0x2c0] sm:$0xff]
    %v623 = vld [vmem:[#allocation11 + $0x2c8] sm:$0xff]
    %v624 = vld [vmem:[#allocation11 + $0x2d0] sm:$0xff]
    %v625 = vld [vmem:[#allocation11 + $0x2d8] sm:$0xff]
    %v626 = vld [vmem:[#allocation11 + $0x2e0] sm:$0xff]
    %v627 = vld [vmem:[#allocation11 + $0x2e8] sm:$0xff]
    %v628 = vld [vmem:[#allocation11 + $0x2f0] sm:$0xff]
    %v629 = vld [vmem:[#allocation11 + $0x2f8] sm:$0xff]
    %v630 = vld [vmem:[#allocation11 + $0x300] sm:$0xff]
    %v631 = vld [vmem:[#allocation11 + $0x308] sm:$0xff]
    %v632 = vld [vmem:[#allocation11 + $0x310] sm:$0xff]
    %v633 = vld [vmem:[#allocation11 + $0x318] sm:$0xff]
    %v634 = vld [vmem:[#allocation11 + $0x320] sm:$0xff]
    %v635 = vld [vmem:[#allocation11 + $0x328] sm:$0xff]
    %v636 = vld [vmem:[#allocation11 + $0x330] sm:$0xff]
    %v637 = vld [vmem:[#allocation11 + $0x338] sm:$0xff]
    %v638 = vld [vmem:[#allocation11 + $0x340] sm:$0xff]
    %v639 = vld [vmem:[#allocation11 + $0x348] sm:$0xff]
    %v640 = vld [vmem:[#allocation11 + $0x350] sm:$0xff]
    %v641 = vld [vmem:[#allocation11 + $0x358] sm:$0xff]
    %v642 = vld [vmem:[#allocation11 + $0x360] sm:$0xff]
    %v643 = vld [vmem:[#allocation11 + $0x368] sm:$0xff]
    %v644 = vld [vmem:[#allocation11 + $0x370] sm:$0xff]
    %v645 = vld [vmem:[#allocation11 + $0x378] sm:$0xff]
    %v646 = vld [vmem:[#allocation11 + $0x380] sm:$0xff]
    %v647 = vld [vmem:[#allocation11 + $0x388] sm:$0xff]
    %v648 = vld [vmem:[#allocation11 + $0x390] sm:$0xff]
    %v649 = vld [vmem:[#allocation11 + $0x398] sm:$0xff]
    %v650 = vld [vmem:[#allocation11 + $0x3a0] sm:$0xff]
    %v651 = vld [vmem:[#allocation11 + $0x3a8] sm:$0xff]
    %v652 = vld [vmem:[#allocation11 + $0x3b0] sm:$0xff]
    %v653 = vld [vmem:[#allocation11 + $0x3b8] sm:$0xff]
    %v654 = vld [vmem:[#allocation11 + $0x3c0] sm:$0xff]
    %v655 = vld [vmem:[#allocation11 + $0x3c8] sm:$0xff]
    %v656 = vld [vmem:[#allocation11 + $0x3d0] sm:$0xff]
    %v657 = vld [vmem:[#allocation11 + $0x3d8] sm:$0xff]
    %v658 = vld [vmem:[#allocation11 + $0x3e0] sm:$0xff]
    %v659 = vld [vmem:[#allocation11 + $0x3e8] sm:$0xff]
    %v660 = vld [vmem:[#allocation11 + $0x3f0] sm:$0xff]
    %v661 = vld [vmem:[#allocation11 + $0x3f8] sm:$0xff]
    %v662 = vld [vmem:[#allocation11 + $0x400] sm:$0xff]
    %v663 = vld [vmem:[#allocation11 + $0x408] sm:$0xff]
    %v664 = vld [vmem:[#allocation11 + $0x410] sm:$0xff]
    %v665 = vld [vmem:[#allocation11 + $0x418] sm:$0xff]
    %v666 = vld [vmem:[#allocation11 + $0x420] sm:$0xff]
    %v667 = vld [vmem:[#allocation11 + $0x428] sm:$0xff]
    %v668 = vld [vmem:[#allocation11 + $0x430] sm:$0xff]
    %v669 = vld [vmem:[#allocation11 + $0x438] sm:$0xff]
    %v670 = vld [vmem:[#allocation11 + $0x440] sm:$0xff]
    %v671 = vld [vmem:[#allocation11 + $0x448] sm:$0xff]
    %v672 = vld [vmem:[#allocation11 + $0x450] sm:$0xff]
    %v673 = vld [vmem:[#allocation11 + $0x458] sm:$0xff]
    %v674 = vld [vmem:[#allocation11 + $0x460] sm:$0xff]
    %v675 = vld [vmem:[#allocation11 + $0x468] sm:$0xff]
    %v676 = vld [vmem:[#allocation11 + $0x470] sm:$0xff]
    %v677 = vld [vmem:[#allocation11 + $0x478] sm:$0xff]
    %v678 = vld [vmem:[#allocation11 + $0x480] sm:$0xff]
    %v679 = vld [vmem:[#allocation11 + $0x488] sm:$0xff]
    %v680 = vld [vmem:[#allocation11 + $0x490] sm:$0xff]
    %v681 = vld [vmem:[#allocation11 + $0x498] sm:$0xff]
    %v682 = vld [vmem:[#allocation11 + $0x4a0] sm:$0xff]
    %v683 = vld [vmem:[#allocation11 + $0x4a8] sm:$0xff]
    %v684 = vld [vmem:[#allocation11 + $0x4b0] sm:$0xff]
    %v685 = vld [vmem:[#allocation11 + $0x4b8] sm:$0xff]
    %v686 = vld [vmem:[#allocation11 + $0x4c0] sm:$0xff]
    %v687 = vld [vmem:[#allocation11 + $0x4c8] sm:$0xff]
    %v688 = vld [vmem:[#allocation11 + $0x4d0] sm:$0xff]
    %v689 = vld [vmem:[#allocation11 + $0x4d8] sm:$0xff]
    %v690 = vld [vmem:[#allocation11 + $0x4e0] sm:$0xff]
    %v691 = vld [vmem:[#allocation11 + $0x4e8] sm:$0xff]
    %v692 = vld [vmem:[#allocation11 + $0x4f0] sm:$0xff]
    %v693 = vld [vmem:[#allocation11 + $0x4f8] sm:$0xff]
    %v694 = vld [vmem:[#allocation11 + $0x500] sm:$0xff]
    %v695 = vld [vmem:[#allocation11 + $0x508] sm:$0xff]
    %v696 = vld [vmem:[#allocation11 + $0x510] sm:$0xff]
    %v697 = vld [vmem:[#allocation11 + $0x518] sm:$0xff]
    %v698 = vld [vmem:[#allocation11 + $0x520] sm:$0xff]
    %v699 = vld [vmem:[#allocation11 + $0x528] sm:$0xff]
    %v700 = vld [vmem:[#allocation11 + $0x530] sm:$0xff]
    %v701 = vld [vmem:[#allocation11 + $0x538] sm:$0xff]
    %v702 = vld [vmem:[#allocation11 + $0x540] sm:$0xff]
    %v703 = vld [vmem:[#allocation11 + $0x548] sm:$0xff]
    %v704 = vld [vmem:[#allocation11 + $0x550] sm:$0xff]
    %v705 = vld [vmem:[#allocation11 + $0x558] sm:$0xff]
    %v706 = vld [vmem:[#allocation11 + $0x560] sm:$0xff]
    %v707 = vld [vmem:[#allocation11 + $0x568] sm:$0xff]
    %v708 = vld [vmem:[#allocation11 + $0x570] sm:$0xff]
    %v709 = vld [vmem:[#allocation11 + $0x578] sm:$0xff]
    %v710 = vld [vmem:[#allocation11 + $0x580] sm:$0xff]
    %v711 = vld [vmem:[#allocation11 + $0x588] sm:$0xff]
    %v712 = vld [vmem:[#allocation11 + $0x590] sm:$0xff]
    %v713 = vld [vmem:[#allocation11 + $0x598] sm:$0xff]
    %v714 = vld [vmem:[#allocation11 + $0x5a0] sm:$0xff]
    %v715 = vld [vmem:[#allocation11 + $0x5a8] sm:$0xff]
    %v716 = vld [vmem:[#allocation11 + $0x5b0] sm:$0xff]
    %v717 = vld [vmem:[#allocation11 + $0x5b8] sm:$0xff]
    %v718 = vld [vmem:[#allocation11 + $0x5c0] sm:$0xff]
    %v719 = vld [vmem:[#allocation11 + $0x5c8] sm:$0xff]
    %v720 = vld [vmem:[#allocation11 + $0x5d0] sm:$0xff]
    %v721 = vld [vmem:[#allocation11 + $0x5d8] sm:$0xff]
    %v722 = vld [vmem:[#allocation11 + $0x5e0] sm:$0xff]
    %v723 = vld [vmem:[#allocation11 + $0x5e8] sm:$0xff]
    %v724 = vld [vmem:[#allocation11 + $0x5f0] sm:$0xff]
    %v725 = vld [vmem:[#allocation11 + $0x5f8] sm:$0xff]
    %v726 = vld [vmem:[#allocation11 + $0x600] sm:$0xff]
    %v727 = vld [vmem:[#allocation11 + $0x608] sm:$0xff]
    %v728 = vld [vmem:[#allocation11 + $0x610] sm:$0xff]
    %v729 = vld [vmem:[#allocation11 + $0x618] sm:$0xff]
    %v730 = vld [vmem:[#allocation11 + $0x620] sm:$0xff]
    %v731 = vld [vmem:[#allocation11 + $0x628] sm:$0xff]
    %v732 = vld [vmem:[#allocation11 + $0x630] sm:$0xff]
    %v733 = vld [vmem:[#allocation11 + $0x638] sm:$0xff]
    %v734 = vld [vmem:[#allocation11 + $0x640] sm:$0xff]
    %v735 = vld [vmem:[#allocation11 + $0x648] sm:$0xff]
    %v736 = vld [vmem:[#allocation11 + $0x650] sm:$0xff]
    %v737 = vld [vmem:[#allocation11 + $0x658] sm:$0xff]
    %v738 = vld [vmem:[#allocation11 + $0x660] sm:$0xff]
    %v739 = vld [vmem:[#allocation11 + $0x668] sm:$0xff]
    %v740 = vld [vmem:[#allocation11 + $0x670] sm:$0xff]
    %v741 = vld [vmem:[#allocation11 + $0x678] sm:$0xff]
    %v742 = vld [vmem:[#allocation11 + $0x680] sm:$0xff]
    %v743 = vld [vmem:[#allocation11 + $0x688] sm:$0xff]
    %v744 = vld [vmem:[#allocation11 + $0x690] sm:$0xff]
    %v745 = vld [vmem:[#allocation11 + $0x698] sm:$0xff]
    %v746 = vld [vmem:[#allocation11 + $0x6a0] sm:$0xff]
    %v747 = vld [vmem:[#allocation11 + $0x6a8] sm:$0xff]
    %v748 = vld [vmem:[#allocation11 + $0x6b0] sm:$0xff]
    %v749 = vld [vmem:[#allocation11 + $0x6b8] sm:$0xff]
    %v750 = vld [vmem:[#allocation11 + $0x6c0] sm:$0xff]
    %v751 = vld [vmem:[#allocation11 + $0x6c8] sm:$0xff]
    %v752 = vld [vmem:[#allocation11 + $0x6d0] sm:$0xff]
    %v753 = vld [vmem:[#allocation11 + $0x6d8] sm:$0xff]
    %v754 = vld [vmem:[#allocation11 + $0x6e0] sm:$0xff]
    %v755 = vld [vmem:[#allocation11 + $0x6e8] sm:$0xff]
    %v756 = vld [vmem:[#allocation11 + $0x6f0] sm:$0xff]
    %v757 = vld [vmem:[#allocation11 + $0x6f8] sm:$0xff]
    %v758 = vld [vmem:[#allocation11 + $0x700] sm:$0xff]
    %v759 = vld [vmem:[#allocation11 + $0x708] sm:$0xff]
    %v760 = vld [vmem:[#allocation11 + $0x710] sm:$0xff]
    %v761 = vld [vmem:[#allocation11 + $0x718] sm:$0xff]
    %v762 = vld [vmem:[#allocation11 + $0x720] sm:$0xff]
    %v763 = vld [vmem:[#allocation11 + $0x728] sm:$0xff]
    %v764 = vld [vmem:[#allocation11 + $0x730] sm:$0xff]
    %v765 = vld [vmem:[#allocation11 + $0x738] sm:$0xff]
    %v766 = vld [vmem:[#allocation11 + $0x740] sm:$0xff]
    %v767 = vld [vmem:[#allocation11 + $0x748] sm:$0xff]
    %v768 = vld [vmem:[#allocation11 + $0x750] sm:$0xff]
    %v769 = vld [vmem:[#allocation11 + $0x758] sm:$0xff]
    %v770 = vld [vmem:[#allocation11 + $0x760] sm:$0xff]
    %v771 = vld [vmem:[#allocation11 + $0x768] sm:$0xff]
    %v772 = vld [vmem:[#allocation11 + $0x770] sm:$0xff]
    %v773 = vld [vmem:[#allocation11 + $0x778] sm:$0xff]
    %v774 = vld [vmem:[%s6] sm:$0x7]
    %v776 = vperm.slane %v774, 0
    %v777 = vperm.slane %v774, 1
    %v778 = vperm.slane %v774, 2
    %782 = vmatpush.msra.mxu0 %v579
    %783 = vmatpush.msra.mxu0 %v576
    %784 = vmatpush.msra.mxu0 %v573
    %785 = vmatpush.msra.mxu0 %v570
    %786 = vmatpush.msra.mxu0 %v567
    %787 = vmatpush.msra.mxu0 %v564
    %788 = vmatpush.msra.mxu0 %v561
    %789 = vmatpush.msra.mxu0 %v558
    %790 = vmatpush.msra.mxu0 %v555
    %791 = vmatpush.msra.mxu0 %v552
    %792 = vmatpush.msra.mxu0 %v549
    %793 = vmatpush.msra.mxu0 %v546
    %794 = vmatpush.msra.mxu0 %v543
    %795 = vmatpush.msra.mxu0 %v540
    %796 = vmatpush.msra.mxu0 %v537
    %797 = vmatpush.msra.mxu0 %v534
    %798 = vmatmul.f32.gmra.mxu0 %v524
    %v799 = vpop.f32.mrf.mxu0
    %v800 = vadd.f32 %v776, %v799
    %801 = vmatmul.f32.gmra.mxu0 %v529
    %v802 = vpop.f32.mrf.mxu0
    %v803 = vadd.f32 %v776, %v802
    %804 = vdwg.mxu0
    %805 = vmatpush.msra.mxu0 %v627
    %806 = vmatpush.msra.mxu0 %v624
    %807 = vmatpush.msra.mxu0 %v621
    %808 = vmatpush.msra.mxu0 %v618
    %809 = vmatpush.msra.mxu0 %v615
    %810 = vmatpush.msra.mxu0 %v612
    %811 = vmatpush.msra.mxu0 %v609
    %812 = vmatpush.msra.mxu0 %v606
    %813 = vmatpush.msra.mxu0 %v603
    %814 = vmatpush.msra.mxu0 %v600
    %815 = vmatpush.msra.mxu0 %v597
    %816 = vmatpush.msra.mxu0 %v594
    %817 = vmatpush.msra.mxu0 %v591
    %818 = vmatpush.msra.mxu0 %v588
    %819 = vmatpush.msra.mxu0 %v585
    %820 = vmatpush.msra.mxu0 %v582
    %821 = vmatmul.f32.gmra.mxu0 %v525
    %v822 = vpop.f32.mrf.mxu0
    %v823 = vadd.f32 %v800, %v822
    %824 = vmatmul.f32.gmra.mxu0 %v530
    %v825 = vpop.f32.mrf.mxu0
    %v826 = vadd.f32 %v803, %v825
    %827 = vdwg.mxu0
    %828 = vmatpush.msra.mxu0 %v675
    %829 = vmatpush.msra.mxu0 %v672
    %830 = vmatpush.msra.mxu0 %v669
    %831 = vmatpush.msra.mxu0 %v666
    %832 = vmatpush.msra.mxu0 %v663
    %833 = vmatpush.msra.mxu0 %v660
    %834 = vmatpush.msra.mxu0 %v657
    %835 = vmatpush.msra.mxu0 %v654
    %836 = vmatpush.msra.mxu0 %v651
    %837 = vmatpush.msra.mxu0 %v648
    %838 = vmatpush.msra.mxu0 %v645
    %839 = vmatpush.msra.mxu0 %v642
    %840 = vmatpush.msra.mxu0 %v639
    %841 = vmatpush.msra.mxu0 %v636
    %842 = vmatpush.msra.mxu0 %v633
    %843 = vmatpush.msra.mxu0 %v630
    %844 = vmatmul.f32.gmra.mxu0 %v526
    %v845 = vpop.f32.mrf.mxu0
    %v846 = vadd.f32 %v823, %v845
    %847 = vmatmul.f32.gmra.mxu0 %v531
    %v848 = vpop.f32.mrf.mxu0
    %v849 = vadd.f32 %v826, %v848
    %850 = vdwg.mxu0
    %851 = vmatpush.msra.mxu0 %v723
    %852 = vmatpush.msra.mxu0 %v720
    %853 = vmatpush.msra.mxu0 %v717
    %854 = vmatpush.msra.mxu0 %v714
    %855 = vmatpush.msra.mxu0 %v711
    %856 = vmatpush.msra.mxu0 %v708
    %857 = vmatpush.msra.mxu0 %v705
    %858 = vmatpush.msra.mxu0 %v702
    %859 = vmatpush.msra.mxu0 %v699
    %860 = vmatpush.msra.mxu0 %v696
    %861 = vmatpush.msra.mxu0 %v693
    %862 = vmatpush.msra.mxu0 %v690
    %863 = vmatpush.msra.mxu0 %v687
    %864 = vmatpush.msra.mxu0 %v684
    %865 = vmatpush.msra.mxu0 %v681
    %866 = vmatpush.msra.mxu0 %v678
    %867 = vmatmul.f32.gmra.mxu0 %v527
    %v868 = vpop.f32.mrf.mxu0
    %v869 = vadd.f32 %v846, %v868
    %870 = vmatmul.f32.gmra.mxu0 %v532
    %v871 = vpop.f32.mrf.mxu0
    %v872 = vadd.f32 %v849, %v871
    %873 = vdwg.mxu0
    %874 = vmatpush.msra.mxu0 %v771
    %875 = vmatpush.msra.mxu0 %v768
    %876 = vmatpush.msra.mxu0 %v765
    %877 = vmatpush.msra.mxu0 %v762
    %878 = vmatpush.msra.mxu0 %v759
    %879 = vmatpush.msra.mxu0 %v756
    %880 = vmatpush.msra.mxu0 %v753
    %881 = vmatpush.msra.mxu0 %v750
    %882 = vmatpush.msra.mxu0 %v747
    %883 = vmatpush.msra.mxu0 %v744
    %884 = vmatpush.msra.mxu0 %v741
    %885 = vmatpush.msra.mxu0 %v738
    %886 = vmatpush.msra.mxu0 %v735
    %887 = vmatpush.msra.mxu0 %v732
    %888 = vmatpush.msra.mxu0 %v729
    %889 = vmatpush.msra.mxu0 %v726
    %890 = vmatmul.f32.gmra.mxu0 %v528
    %v891 = vpop.f32.mrf.mxu0
    %v892 = vadd.f32 %v869, %v891
    %893 = vmatmul.f32.gmra.mxu0 %v533
    %v894 = vpop.f32.mrf.mxu0
    %v895 = vadd.f32 %v872, %v894
    %896 = vdwg.mxu0
    %897 = vmatpush.msra.mxu0 %v580
    %898 = vmatpush.msra.mxu0 %v577
    %899 = vmatpush.msra.mxu0 %v574
    %900 = vmatpush.msra.mxu0 %v571
    %901 = vmatpush.msra.mxu0 %v568
    %902 = vmatpush.msra.mxu0 %v565
    %903 = vmatpush.msra.mxu0 %v562
    %904 = vmatpush.msra.mxu0 %v559
    %905 = vmatpush.msra.mxu0 %v556
    %906 = vmatpush.msra.mxu0 %v553
    %907 = vmatpush.msra.mxu0 %v550
    %908 = vmatpush.msra.mxu0 %v547
    %909 = vmatpush.msra.mxu0 %v544
    %910 = vmatpush.msra.mxu0 %v541
    %911 = vmatpush.msra.mxu0 %v538
    %912 = vmatpush.msra.mxu0 %v535
    %913 = vmatmul.f32.gmra.mxu0 %v524
    %v914 = vpop.f32.mrf.mxu0
    %v915 = vadd.f32 %v777, %v914
    %916 = vmatmul.f32.gmra.mxu0 %v529
    %v917 = vpop.f32.mrf.mxu0
    %v918 = vadd.f32 %v777, %v917
    %919 = vdwg.mxu0
    %920 = vmatpush.msra.mxu0 %v628
    %921 = vmatpush.msra.mxu0 %v625
    %922 = vmatpush.msra.mxu0 %v622
    %923 = vmatpush.msra.mxu0 %v619
    %924 = vmatpush.msra.mxu0 %v616
    %925 = vmatpush.msra.mxu0 %v613
    %926 = vmatpush.msra.mxu0 %v610
    %927 = vmatpush.msra.mxu0 %v607
    %928 = vmatpush.msra.mxu0 %v604
    %929 = vmatpush.msra.mxu0 %v601
    %930 = vmatpush.msra.mxu0 %v598
    %931 = vmatpush.msra.mxu0 %v595
    %932 = vmatpush.msra.mxu0 %v592
    %933 = vmatpush.msra.mxu0 %v589
    %934 = vmatpush.msra.mxu0 %v586
    %935 = vmatpush.msra.mxu0 %v583
    %936 = vmatmul.f32.gmra.mxu0 %v525
    %v937 = vpop.f32.mrf.mxu0
    %v938 = vadd.f32 %v915, %v937
    %939 = vmatmul.f32.gmra.mxu0 %v530
    %v940 = vpop.f32.mrf.mxu0
    %v941 = vadd.f32 %v918, %v940
    %942 = vdwg.mxu0
    %943 = vmatpush.msra.mxu0 %v676
    %944 = vmatpush.msra.mxu0 %v673
    %945 = vmatpush.msra.mxu0 %v670
    %946 = vmatpush.msra.mxu0 %v667
    %947 = vmatpush.msra.mxu0 %v664
    %948 = vmatpush.msra.mxu0 %v661
    %949 = vmatpush.msra.mxu0 %v658
    %950 = vmatpush.msra.mxu0 %v655
    %951 = vmatpush.msra.mxu0 %v652
    %952 = vmatpush.msra.mxu0 %v649
    %953 = vmatpush.msra.mxu0 %v646
    %954 = vmatpush.msra.mxu0 %v643
    %955 = vmatpush.msra.mxu0 %v640
    %956 = vmatpush.msra.mxu0 %v637
    %957 = vmatpush.msra.mxu0 %v634
    %958 = vmatpush.msra.mxu0 %v631
    %959 = vmatmul.f32.gmra.mxu0 %v526
    %v960 = vpop.f32.mrf.mxu0
    %v961 = vadd.f32 %v938, %v960
    %962 = vmatmul.f32.gmra.mxu0 %v531
    %v963 = vpop.f32.mrf.mxu0
    %v964 = vadd.f32 %v941, %v963
    %965 = vdwg.mxu0
    %966 = vmatpush.msra.mxu0 %v724
    %967 = vmatpush.msra.mxu0 %v721
    %968 = vmatpush.msra.mxu0 %v718
    %969 = vmatpush.msra.mxu0 %v715
    %970 = vmatpush.msra.mxu0 %v712
    %971 = vmatpush.msra.mxu0 %v709
    %972 = vmatpush.msra.mxu0 %v706
    %973 = vmatpush.msra.mxu0 %v703
    %974 = vmatpush.msra.mxu0 %v700
    %975 = vmatpush.msra.mxu0 %v697
    %976 = vmatpush.msra.mxu0 %v694
    %977 = vmatpush.msra.mxu0 %v691
    %978 = vmatpush.msra.mxu0 %v688
    %979 = vmatpush.msra.mxu0 %v685
    %980 = vmatpush.msra.mxu0 %v682
    %981 = vmatpush.msra.mxu0 %v679
    %982 = vmatmul.f32.gmra.mxu0 %v527
    %v983 = vpop.f32.mrf.mxu0
    %v984 = vadd.f32 %v961, %v983
    %985 = vmatmul.f32.gmra.mxu0 %v532
    %v986 = vpop.f32.mrf.mxu0
    %v987 = vadd.f32 %v964, %v986
    %988 = vdwg.mxu0
    %989 = vmatpush.msra.mxu0 %v772
    %990 = vmatpush.msra.mxu0 %v769
    %991 = vmatpush.msra.mxu0 %v766
    %992 = vmatpush.msra.mxu0 %v763
    %993 = vmatpush.msra.mxu0 %v760
    %994 = vmatpush.msra.mxu0 %v757
    %995 = vmatpush.msra.mxu0 %v754
    %996 = vmatpush.msra.mxu0 %v751
    %997 = vmatpush.msra.mxu0 %v748
    %998 = vmatpush.msra.mxu0 %v745
    %999 = vmatpush.msra.mxu0 %v742
    %1000 = vmatpush.msra.mxu0 %v739
    %1001 = vmatpush.msra.mxu0 %v736
    %1002 = vmatpush.msra.mxu0 %v733
    %1003 = vmatpush.msra.mxu0 %v730
    %1004 = vmatpush.msra.mxu0 %v727
    %1005 = vmatmul.f32.gmra.mxu0 %v528
    %v1006 = vpop.f32.mrf.mxu0
    %v1007 = vadd.f32 %v984, %v1006
    %1008 = vmatmul.f32.gmra.mxu0 %v533
    %v1009 = vpop.f32.mrf.mxu0
    %v1010 = vadd.f32 %v987, %v1009
    %1011 = vdwg.mxu0
    %1012 = vmatpush.msra.mxu0 %v581
    %1013 = vmatpush.msra.mxu0 %v578
    %1014 = vmatpush.msra.mxu0 %v575
    %1015 = vmatpush.msra.mxu0 %v572
    %1016 = vmatpush.msra.mxu0 %v569
    %1017 = vmatpush.msra.mxu0 %v566
    %1018 = vmatpush.msra.mxu0 %v563
    %1019 = vmatpush.msra.mxu0 %v560
    %1020 = vmatpush.msra.mxu0 %v557
    %1021 = vmatpush.msra.mxu0 %v554
    %1022 = vmatpush.msra.mxu0 %v551
    %1023 = vmatpush.msra.mxu0 %v548
    %1024 = vmatpush.msra.mxu0 %v545
    %1025 = vmatpush.msra.mxu0 %v542
    %1026 = vmatpush.msra.mxu0 %v539
    %1027 = vmatpush.msra.mxu0 %v536
    %1028 = vmatmul.f32.gmra.mxu0 %v524
    %v1029 = vpop.f32.mrf.mxu0
    %v1030 = vadd.f32 %v778, %v1029
    %1031 = vmatmul.f32.gmra.mxu0 %v529
    %v1032 = vpop.f32.mrf.mxu0
    %v1033 = vadd.f32 %v778, %v1032
    %1034 = vdwg.mxu0
    %1035 = vmatpush.msra.mxu0 %v629
    %1036 = vmatpush.msra.mxu0 %v626
    %1037 = vmatpush.msra.mxu0 %v623
    %1038 = vmatpush.msra.mxu0 %v620
    %1039 = vmatpush.msra.mxu0 %v617
    %1040 = vmatpush.msra.mxu0 %v614
    %1041 = vmatpush.msra.mxu0 %v611
    %1042 = vmatpush.msra.mxu0 %v608
    %1043 = vmatpush.msra.mxu0 %v605
    %1044 = vmatpush.msra.mxu0 %v602
    %1045 = vmatpush.msra.mxu0 %v599
    %1046 = vmatpush.msra.mxu0 %v596
    %1047 = vmatpush.msra.mxu0 %v593
    %1048 = vmatpush.msra.mxu0 %v590
    %1049 = vmatpush.msra.mxu0 %v587
    %1050 = vmatpush.msra.mxu0 %v584
    %1051 = vmatmul.f32.gmra.mxu0 %v525
    %v1052 = vpop.f32.mrf.mxu0
    %v1053 = vadd.f32 %v1030, %v1052
    %1054 = vmatmul.f32.gmra.mxu0 %v530
    %v1055 = vpop.f32.mrf.mxu0
    %v1056 = vadd.f32 %v1033, %v1055
    %1057 = vdwg.mxu0
    %1058 = vmatpush.msra.mxu0 %v677
    %1059 = vmatpush.msra.mxu0 %v674
    %1060 = vmatpush.msra.mxu0 %v671
    %1061 = vmatpush.msra.mxu0 %v668
    %1062 = vmatpush.msra.mxu0 %v665
    %1063 = vmatpush.msra.mxu0 %v662
    %1064 = vmatpush.msra.mxu0 %v659
    %1065 = vmatpush.msra.mxu0 %v656
    %1066 = vmatpush.msra.mxu0 %v653
    %1067 = vmatpush.msra.mxu0 %v650
    %1068 = vmatpush.msra.mxu0 %v647
    %1069 = vmatpush.msra.mxu0 %v644
    %1070 = vmatpush.msra.mxu0 %v641
    %1071 = vmatpush.msra.mxu0 %v638
    %1072 = vmatpush.msra.mxu0 %v635
    %1073 = vmatpush.msra.mxu0 %v632
    %1074 = vmatmul.f32.gmra.mxu0 %v526
    %v1075 = vpop.f32.mrf.mxu0
    %v1076 = vadd.f32 %v1053, %v1075
    %1077 = vmatmul.f32.gmra.mxu0 %v531
    %v1078 = vpop.f32.mrf.mxu0
    %v1079 = vadd.f32 %v1056, %v1078
    %1080 = vdwg.mxu0
    %1081 = vmatpush.msra.mxu0 %v725
    %1082 = vmatpush.msra.mxu0 %v722
    %1083 = vmatpush.msra.mxu0 %v719
    %1084 = vmatpush.msra.mxu0 %v716
    %1085 = vmatpush.msra.mxu0 %v713
    %1086 = vmatpush.msra.mxu0 %v710
    %1087 = vmatpush.msra.mxu0 %v707
    %1088 = vmatpush.msra.mxu0 %v704
    %1089 = vmatpush.msra.mxu0 %v701
    %1090 = vmatpush.msra.mxu0 %v698
    %1091 = vmatpush.msra.mxu0 %v695
    %1092 = vmatpush.msra.mxu0 %v692
    %1093 = vmatpush.msra.mxu0 %v689
    %1094 = vmatpush.msra.mxu0 %v686
    %1095 = vmatpush.msra.mxu0 %v683
    %1096 = vmatpush.msra.mxu0 %v680
    %1097 = vmatmul.f32.gmra.mxu0 %v527
    %v1098 = vpop.f32.mrf.mxu0
    %v1099 = vadd.f32 %v1076, %v1098
    %1100 = vmatmul.f32.gmra.mxu0 %v532
    %v1101 = vpop.f32.mrf.mxu0
    %v1102 = vadd.f32 %v1079, %v1101
    %1103 = vdwg.mxu0
    %1104 = vmatpush.msra.mxu0 %v773
    %1105 = vmatpush.msra.mxu0 %v770
    %1106 = vmatpush.msra.mxu0 %v767
    %1107 = vmatpush.msra.mxu0 %v764
    %1108 = vmatpush.msra.mxu0 %v761
    %1109 = vmatpush.msra.mxu0 %v758
    %1110 = vmatpush.msra.mxu0 %v755
    %1111 = vmatpush.msra.mxu0 %v752
    %1112 = vmatpush.msra.mxu0 %v749
    %1113 = vmatpush.msra.mxu0 %v746
    %1114 = vmatpush.msra.mxu0 %v743
    %1115 = vmatpush.msra.mxu0 %v740
    %1116 = vmatpush.msra.mxu0 %v737
    %1117 = vmatpush.msra.mxu0 %v734
    %1118 = vmatpush.msra.mxu0 %v731
    %1119 = vmatpush.msra.mxu0 %v728
    %1120 = vmatmul.f32.gmra.mxu0 %v528
    %v1121 = vpop.f32.mrf.mxu0
    %v1122 = vadd.f32 %v1099, %v1121
    %1123 = vmatmul.f32.gmra.mxu0 %v533
    %v1124 = vpop.f32.mrf.mxu0
    %v1125 = vadd.f32 %v1102, %v1124
    %1126 = vdwg.mxu0
    %1127 = vst [vmem:[#allocation13] sm:$0xff] %v892
    %1128 = vst [vmem:[#allocation13 + $0x8] sm:$0xff] %v1007
    %1129 = vst [vmem:[#allocation13 + $0x10] sm:$0xff] %v1122
    %1130 = vst [vmem:[#allocation13 + $0x18] sm:$0xff] %v895
    %1131 = vst [vmem:[#allocation13 + $0x20] sm:$0xff] %v1010
    %1132 = vst [vmem:[#allocation13 + $0x28] sm:$0xff] %v1125
    %v1133 = vld [vmem:[#allocation7] sm:$0x7]
    %v1135 = vperm.slane %v1133, 0
    %v1136 = vperm.slane %v1133, 1
    %v1137 = vperm.slane %v1133, 2
    %v1141 = vmul.f32 %v892, %v1135
    %v1142 = vmul.f32 %v1007, %v1136
    %v1143 = vmul.f32 %v1122, %v1137
    %v1144 = vmul.f32 %v895, %v1135
    %v1145 = vmul.f32 %v1010, %v1136
    %v1146 = vmul.f32 %v1125, %v1137
    %v1147 = vld [vmem:[#allocation5] sm:$0x7]
    %v1149 = vperm.slane %v1147, 0
    %v1150 = vperm.slane %v1147, 1
    %v1151 = vperm.slane %v1147, 2
    %v1155 = vadd.f32 %v1141, %v1149
    %v1156 = vadd.f32 %v1142, %v1150
    %v1157 = vadd.f32 %v1143, %v1151
    %v1158 = vadd.f32 %v1144, %v1149
    %v1159 = vadd.f32 %v1145, %v1150
    %v1160 = vadd.f32 %v1146, %v1151
    %1161 = vst [vmem:[#allocation14] sm:$0xff] %v1155
    %1162 = vst [vmem:[#allocation14 + $0x8] sm:$0xff] %v1156
    %1163 = vst [vmem:[#allocation14 + $0x10] sm:$0xff] %v1157
    %1164 = vst [vmem:[#allocation14 + $0x18] sm:$0xff] %v1158
    %1165 = vst [vmem:[#allocation14 + $0x20] sm:$0xff] %v1159
    %1166 = vst [vmem:[#allocation14 + $0x28] sm:$0xff] %v1160
    // Predicated region
    $region54: #{tpu_custom_call.1} parent=1 // pred_check
      _
    $region55: #{tpu_custom_call.1} parent=1 // pred_check_branch
      %1168 = sbr.rel (0) target = $region57
    $region56: #{tpu_custom_call.1} parent=1 // pred_region
      %1170 = vsyncadd [#allocation4], 0
      %s1171 = sshll.u32 [#allocation13], 4
      %s1172 = int_to_ptr.vmem [resolvable:$true] %s1171
      %s1173 = sshll.u32 %s7, 4
      %s1174 = int_to_ptr.hbm [resolvable:$true] %s1173
      %1179 = dma.vmem_to_hbm [thread:$0]  %s1172, 768, %s1174, [#allocation4], 384, 384, 24
    $region57: #{tpu_custom_call.1} parent=1 // pred_fallthru
      _
    // Predicated region
    $region58: #{tpu_custom_call.1} parent=1 // pred_check
      _
    $region59: #{tpu_custom_call.1} parent=1 // pred_check_branch
      %1181 = sbr.rel (0) target = $region61
    $region60: #{tpu_custom_call.1} parent=1 // pred_region
      %1183 = vsyncadd [#allocation15], 0
      %s1184 = sshll.u32 [#allocation14], 4
      %s1185 = int_to_ptr.vmem [resolvable:$true] %s1184
      %s1186 = sshll.u32 %s8, 4
      %s1187 = int_to_ptr.hbm [resolvable:$true] %s1186
      %1192 = dma.vmem_to_hbm [thread:$0]  %s1185, 768, %s1187, [#allocation15], 384, 384, 24
    $region61: #{tpu_custom_call.1} parent=1 // pred_fallthru
      _
    // Predicated region
    $region62: #{tpu_custom_call.1} parent=1 // pred_check
      _
    $region63: #{tpu_custom_call.1} parent=1 // pred_check_branch
      %1194 = sbr.rel (0) target = $region65
    $region64: #{tpu_custom_call.1} parent=1 // pred_region
      %1196 = dma.done [#allocation4], 768
    $region65: #{tpu_custom_call.1} parent=1 // pred_fallthru
      _
    // Predicated region
    $region66: #{tpu_custom_call.1} parent=1 // pred_check
      _
    $region67: #{tpu_custom_call.1} parent=1 // pred_check_branch
      %1198 = sbr.rel (0) target = $region69
    $region68: #{tpu_custom_call.1} parent=1 // pred_region
      %1200 = dma.done [#allocation15], 768
    $region69: #{tpu_custom_call.1} parent=1 // pred_fallthru
      _
    %1201 = vsyncpa [#allocation3], 1
    %1202 = vsyncpa [#allocation6], 1
    %1203 = vsyncpa [#allocation9], 1
    %1204 = vsyncpa [#allocation12], 1
    %1205 = vsyncpa [#allocation4], 1
    %1206 = vsyncpa [#allocation15], 1

</llo_original>
